<compile_context>
chip_gen: v6e
topology: v6e:2x2x1
jax: 0.10.0
libtpu: 0.0.40
codegen_flags: <defaults>
</compile_context>

<pallas_src>
import math
from functools import partial

import jax
import jax.numpy as jnp
from jax.experimental import pallas as pl
from jax.experimental.pallas import tpu as pltpu

# (kernel_size, stride, out_channels) for the three convs — fixed by the module.
_CONV_CFG = ((8, 4, 32), (4, 2, 64), (3, 1, 64))
_TM = 256                        # M tile for large row counts (v5e-safe, bf16)
_VMEM_LIMIT = 32 * 1024 * 1024   # explicit scoped-VMEM budget (fits v5e/v6e/v7x)


def _round_up(x, m):
    return (x + m - 1) // m * m


def _pick_tm(m):
    # Large M: 256-row tiles -> pipelined DMA + megacore-parallel grid.
    # Small M: one full-M block (block shape == full array dim is always legal).
    return _TM if m >= _TM else m


# ------------------------------ Pallas kernels ----------------------------- #
def _linear_kernel(x_ref, w_ref, b_ref, o_ref, *, relu):
    # x:(tm,K) bf16, w:(K,Np) bf16, b:(1,Np) f32 -> o:(tm,Np)
    acc = jnp.dot(x_ref[...], w_ref[...], preferred_element_type=jnp.float32)
    acc = acc + b_ref[...]
    if relu:
        acc = jnp.maximum(acc, 0.0)
    o_ref[...] = acc.astype(o_ref.dtype)


def _mlp_head_kernel(x_ref, w1_ref, b1_ref, w2_ref, b2_ref, o_ref):
    # Fused fc1 (+ReLU) and concatenated critic/actor head; fc1 activation
    # lives entirely on-chip for this row tile.
    h = jnp.dot(x_ref[...], w1_ref[...], preferred_element_type=jnp.float32)
    h = jnp.maximum(h + b1_ref[...], 0.0)
    out = jnp.dot(h.astype(w2_ref.dtype), w2_ref[...],
                  preferred_element_type=jnp.float32)
    o_ref[...] = (out + b2_ref[...]).astype(o_ref.dtype)


# ------------------------------ kernel wrappers ---------------------------- #
def pallas_linear(x, w, b, *, relu, out_dtype):
    """y = x @ w + b (optional ReLU). x:(M,K) bf16, w:(K,Np) bf16, b:(1,Np) f32."""
    M, K = x.shape
    Kw, Np = w.shape
    assert K == Kw, (K, Kw)
    tm = _pick_tm(M)
    grid_m = pl.cdiv(M, tm)
    cost = pl.CostEstimate(
        flops=2 * M * K * Np,
        transcendentals=0,
        bytes_accessed=(M * K * x.dtype.itemsize + K * Np * w.dtype.itemsize
                        + Np * b.dtype.itemsize
                        + M * Np * jnp.dtype(out_dtype).itemsize))
    return pl.pallas_call(
        partial(_linear_kernel, relu=relu),
        out_shape=jax.ShapeDtypeStruct((M, Np), out_dtype),
        grid=(grid_m,),
        in_specs=[
            pl.BlockSpec((tm, K), lambda i: (i, 0)),    # activation rows: tiled
            pl.BlockSpec((K, Np), lambda i: (0, 0)),    # weight: VMEM-resident
            pl.BlockSpec((1, Np), lambda i: (0, 0)),    # bias
        ],
        out_specs=pl.BlockSpec((tm, Np), lambda i: (i, 0)),
        compiler_params=pltpu.CompilerParams(
            dimension_semantics=("parallel",),
            vmem_limit_bytes=_VMEM_LIMIT),
        cost_estimate=cost,
    )(x, w, b)


def pallas_mlp_head(x, w1, b1, w2, b2):
    """Fused fc1(+ReLU) and concatenated critic/actor heads, tiled over rows."""
    M, K = x.shape
    H = w1.shape[1]
    Nh = w2.shape[1]
    tm = _pick_tm(M)
    grid_m = pl.cdiv(M, tm)
    cost = pl.CostEstimate(
        flops=2 * M * (K * H + H * Nh),
        transcendentals=0,
        bytes_accessed=(M * K * 2 + K * H * 2 + H * Nh * 2
                        + (H + Nh) * 4 + M * Nh * 4))
    return pl.pallas_call(
        _mlp_head_kernel,
        out_shape=jax.ShapeDtypeStruct((M, Nh), jnp.float32),
        grid=(grid_m,),
        in_specs=[
            pl.BlockSpec((tm, K), lambda i: (i, 0)),
            pl.BlockSpec((K, H), lambda i: (0, 0)),
            pl.BlockSpec((1, H), lambda i: (0, 0)),
            pl.BlockSpec((H, Nh), lambda i: (0, 0)),
            pl.BlockSpec((1, Nh), lambda i: (0, 0)),
        ],
        out_specs=pl.BlockSpec((tm, Nh), lambda i: (i, 0)),
        compiler_params=pltpu.CompilerParams(
            dimension_semantics=("parallel",),
            vmem_limit_bytes=_VMEM_LIMIT),
        cost_estimate=cost,
    )(x, w1, b1, w2, b2)


# ------------------------------ conv as im2col ----------------------------- #
def _im2col_nhwc(x, ksize, stride):
    # x: (N, H, W, C) -> patches (N*OH*OW, ksize*ksize*C), feature order
    # (kh, kw, c) — must match the weight packing in prepare_params.
    N, H, W, C = x.shape
    OH = (H - ksize) // stride + 1
    OW = (W - ksize) // stride + 1
    cols = []
    for kh in range(ksize):
        for kw in range(ksize):
            cols.append(x[:, kh:kh + stride * OH:stride,
                          kw:kw + stride * OW:stride, :])      # (N,OH,OW,C)
    p = jnp.stack(cols, axis=3)                                # (N,OH,OW,K*K,C)
    return p.reshape(N * OH * OW, ksize * ksize * C), OH, OW


# TODO(synk): move im2col inside the Pallas kernel (DMA the input window into
# VMEM and build patches on-chip) to avoid the HBM patch-matrix expansion at
# large batch / image sizes.
def conv2d_relu(x_nhwc, w, b, *, ksize, stride, cout):
    N = x_nhwc.shape[0]
    patches, OH, OW = _im2col_nhwc(x_nhwc, ksize, stride)
    kp = w.shape[0]
    if patches.shape[1] < kp:          # pad K only (fuses with im2col ops)
        patches = jnp.pad(patches, ((0, 0), (0, kp - patches.shape[1])))
    y = pallas_linear(patches, w, b, relu=True, out_dtype=jnp.bfloat16)
    return y[:, :cout].reshape(N, OH, OW, cout)                # stays NHWC


# ------------------------------ parameters --------------------------------- #
def _orthogonal(key, rows, cols, gain):
    # Mimics torch.nn.init.orthogonal_ on a (rows, cols) weight.
    a = jax.random.normal(key, (max(rows, cols), min(rows, cols)), jnp.float32)
    q, r = jnp.linalg.qr(a)
    q = q * jnp.sign(jnp.diag(r))
    if rows < cols:
        q = q.T
    return gain * q[:rows, :cols]


def conv_out_hw(state_dim):
    _, h, w = state_dim
    for k, s, _ in _CONV_CFG:
        h = (h - k) // s + 1
        w = (w - k) // s + 1
    return h, w


def feature_size(state_dim):
    h, w = conv_out_hw(state_dim)
    return _CONV_CFG[-1][2] * h * w


def init_params(key, state_dim, action_dim):
    """PyTorch-layout float32 parameters (orthogonal init, zero bias)."""
    gain = math.sqrt(2.0)  # calculate_gain('relu')
    ks = jax.random.split(key, 6)
    c_in = state_dim[0]
    feat = feature_size(state_dim)
    p = {}
    p["conv1_w"] = _orthogonal(ks[0], 32, c_in * 8 * 8, gain).reshape(32, c_in, 8, 8)
    p["conv1_b"] = jnp.zeros((32,), jnp.float32)
    p["conv2_w"] = _orthogonal(ks[1], 64, 32 * 4 * 4, gain).reshape(64, 32, 4, 4)
    p["conv2_b"] = jnp.zeros((64,), jnp.float32)
    p["conv3_w"] = _orthogonal(ks[2], 64, 64 * 3 * 3, gain).reshape(64, 64, 3, 3)
    p["conv3_b"] = jnp.zeros((64,), jnp.float32)
    p["fc1_w"] = _orthogonal(ks[3], 512, feat, gain)
    p["fc1_b"] = jnp.zeros((512,), jnp.float32)
    p["critic_w"] = _orthogonal(ks[4], 1, 512, gain)
    p["critic_b"] = jnp.zeros((1,), jnp.float32)
    p["actor_w"] = _orthogonal(ks[5], action_dim, 512, gain)
    p["actor_b"] = jnp.zeros((action_dim,), jnp.float32)
    return p


def prepare_params(raw, state_dim, action_dim):
    """One-time conversion to kernel layout: (K, N) bf16 weights padded to
    lane-dense 128-multiples, NHWC feature order, fused critic/actor head."""

    def pack_conv(w, b):
        o, c, kh, kw = w.shape
        k = kh * kw * c
        wm = w.transpose(2, 3, 1, 0).reshape(k, o)          # rows = (kh, kw, c)
        kp, np_ = _round_up(k, 128), _round_up(o, 128)
        wp = jnp.zeros((kp, np_), jnp.bfloat16).at[:k, :o].set(
            wm.astype(jnp.bfloat16))
        bp = jnp.zeros((1, np_), jnp.float32).at[0, :o].set(b)
        return wp, bp

    conv_w, conv_b = [], []
    for i in range(3):
        wp, bp = pack_conv(raw[f"conv{i + 1}_w"], raw[f"conv{i + 1}_b"])
        conv_w.append(wp)
        conv_b.append(bp)

    # fc1: PyTorch flattens NCHW (c,h,w); we flatten NHWC (h,w,c) -> permute once.
    h3, w3 = conv_out_hw(state_dim)
    c3 = _CONV_CFG[-1][2]
    feat = c3 * h3 * w3
    fw = raw["fc1_w"].reshape(512, c3, h3, w3).transpose(0, 2, 3, 1)
    fw = fw.reshape(512, feat).T                             # (feat, 512)
    kp = _round_up(feat, 128)
    fc1_w = jnp.zeros((kp, 512), jnp.bfloat16).at[:feat, :].set(
        fw.astype(jnp.bfloat16))
    fc1_b = raw["fc1_b"].reshape(1, 512).astype(jnp.float32)

    # Fused head: column 0 = critic value, columns 1..1+A = actor logits.
    hw = jnp.concatenate([raw["critic_w"], raw["actor_w"]], axis=0)  # (1+A, 512)
    hb = jnp.concatenate([raw["critic_b"], raw["actor_b"]], axis=0)  # (1+A,)
    nh = _round_up(1 + action_dim, 128)
    head_w = jnp.zeros((512, nh), jnp.bfloat16).at[:, :1 + action_dim].set(
        hw.T.astype(jnp.bfloat16))
    head_b = jnp.zeros((1, nh), jnp.float32).at[0, :1 + action_dim].set(hb)

    return {"conv_w": conv_w, "conv_b": conv_b,
            "fc1_w": fc1_w, "fc1_b": fc1_b,
            "head_w": head_w, "head_b": head_b}


# -------------------------------- forward ---------------------------------- #
@partial(jax.jit, static_argnames=("action_dim",))
def actor_critic_forward(params, x, *, action_dim):
    # x: (N, C, H, W) f32 NCHW, same interface as the PyTorch module.
    x = jnp.transpose(x, (0, 2, 3, 1)).astype(jnp.bfloat16)    # NHWC bf16, once
    for (ksize, stride, cout), w, b in zip(_CONV_CFG, params["conv_w"],
                                           params["conv_b"]):
        x = conv2d_relu(x, w, b, ksize=ksize, stride=stride, cout=cout)
    n = x.shape[0]
    xf = x.reshape(n, -1)                                      # NHWC flatten
    kp = params["fc1_w"].shape[0]
    if xf.shape[1] < kp:
        xf = jnp.pad(xf, ((0, 0), (0, kp - xf.shape[1])))
    out = pallas_mlp_head(xf, params["fc1_w"], params["fc1_b"],
                          params["head_w"], params["head_b"])
    value = out[:, 0:1]
    logits = out[:, 1:1 + action_dim]
    return logits, value


# --------------------------- pure-JAX reference ----------------------------- #
def reference_forward(raw, x):
    def conv(x, w, b, stride):
        y = jax.lax.conv_general_dilated(
            x, w, window_strides=(stride, stride), padding="VALID",
            dimension_numbers=("NCHW", "OIHW", "NCHW"))
        return jax.nn.relu(y + b[None, :, None, None])
    x = conv(x, raw["conv1_w"], raw["conv1_b"], 4)
    x = conv(x, raw["conv2_w"], raw["conv2_b"], 2)
    x = conv(x, raw["conv3_w"], raw["conv3_b"], 1)
    x = x.reshape(x.shape[0], -1)
    x = jax.nn.relu(x @ raw["fc1_w"].T + raw["fc1_b"])
    value = x @ raw["critic_w"].T + raw["critic_b"]
    logits = x @ raw["actor_w"].T + raw["actor_b"]
    return logits, value


if __name__ == "__main__":
    # state_dim=(4, 36, 36): spatial 36 -> 8 -> 3 -> 1, feature_size = 64.
    state_dim = (4, 36, 36)
    action_dim = 6
    batch = 2

    key = jax.random.PRNGKey(0)
    k_params, k_x = jax.random.split(key)
    raw = init_params(k_params, state_dim, action_dim)
    params = prepare_params(raw, state_dim, action_dim)
    x = jax.random.normal(k_x, (batch,) + state_dim, jnp.float32)

    logits, value = actor_critic_forward(params, x, action_dim=action_dim)
    jax.block_until_ready((logits, value))

    assert logits.shape == (batch, action_dim), logits.shape
    assert value.shape == (batch, 1), value.shape

    # Loose numerical check vs. f32 reference (kernels use bf16 operands).
    ref_logits, ref_value = reference_forward(raw, x)
    diff = jnp.concatenate([(logits - ref_logits).ravel(),
                            (value - ref_value).ravel()])
    ref = jnp.concatenate([ref_logits.ravel(), ref_value.ravel()])
    rel = float(jnp.linalg.norm(diff) / (jnp.linalg.norm(ref) + 1e-6))
    assert rel < 0.1, f"relative error too large: {rel}"

    print("KERNEL_OK")
</pallas_src>

<mosaic_0001>
module attributes {stable_mosaic.version = 11 : i64} {
  func.func @_linear_kernel(%arg0: i32, %arg1: memref<128x256xbf16, #tpu.memory_space<vmem>>, %arg2: memref<256x128xbf16, #tpu.memory_space<vmem>>, %arg3: memref<1x128xf32, #tpu.memory_space<vmem>>, %arg4: memref<128x128xbf16, #tpu.memory_space<vmem>>) attributes {dimension_semantics = [#tpu.dimension_semantics<parallel>], iteration_bounds = array<i64: 1>, scalar_prefetch = 0 : i64, scratch_operands = 0 : i64, tpu.core_type = #tpu.core_type<tc>, window_params = [{transform_indices = @transform_0, window_bounds = array<i64: 128, 256>}, {pipeline_mode = #tpu.pipeline_mode<synchronous>, transform_indices = @transform_1, window_bounds = array<i64: 256, 128>}, {pipeline_mode = #tpu.pipeline_mode<synchronous>, transform_indices = @transform_2, window_bounds = array<i64: 1, 128>}, {transform_indices = @transform_3, window_bounds = array<i64: 128, 128>}]} {
    %c0 = arith.constant 0 : index
    %c0_0 = arith.constant 0 : index
    %0 = vector.load %arg1[%c0, %c0_0] : memref<128x256xbf16, #tpu.memory_space<vmem>>, vector<128x256xbf16>
    %c0_1 = arith.constant 0 : index
    %c0_2 = arith.constant 0 : index
    %1 = vector.load %arg2[%c0_1, %c0_2] : memref<256x128xbf16, #tpu.memory_space<vmem>>, vector<256x128xbf16>
    %cst = arith.constant dense<0.000000e+00> : vector<128x128xf32>
    %2 = tpu.matmul %0, %1, %cst {dimension_numbers = #tpu.dot_dimension_numbers<[1], [0], [0], [1], [0, 0, 1, 1], [], []>} : vector<128x256xbf16>, vector<256x128xbf16>, vector<128x128xf32> -> vector<128x128xf32>
    %c0_3 = arith.constant 0 : index
    %c0_4 = arith.constant 0 : index
    %3 = vector.load %arg3[%c0_3, %c0_4] : memref<1x128xf32, #tpu.memory_space<vmem>>, vector<1x128xf32>
    %4 = vector.broadcast %3 : vector<1x128xf32> to vector<128x128xf32>
    %5 = arith.addf %2, %4 : vector<128x128xf32>
    %cst_5 = arith.constant 0.000000e+00 : f32
    %6 = vector.broadcast %cst_5 : f32 to vector<128x128xf32>
    %7 = arith.maximumf %5, %6 : vector<128x128xf32>
    %8 = arith.truncf %7 : vector<128x128xf32> to vector<128x128xbf16>
    %c0_6 = arith.constant 0 : index
    %c0_7 = arith.constant 0 : index
    %9 = vector.load %arg4[%c0_6, %c0_7] : memref<128x128xbf16, #tpu.memory_space<vmem>>, vector<128x128xbf16>
    tpu.vector_store %arg4[%c0_6, %c0_7], %8 {strides = array<i32>} : memref<128x128xbf16, #tpu.memory_space<vmem>>, vector<128x128xbf16>,
    return
  }
  func.func @transform_0(%arg0: i32) -> (i32, i32) {
    %c0_i32 = arith.constant 0 : i32
    %c0_i32_0 = arith.constant 0 : i32
    return %arg0, %c0_i32 : i32, i32
  }
  func.func @transform_1(%arg0: i32) -> (i32, i32) {
    %c0_i32 = arith.constant 0 : i32
    %c0_i32_0 = arith.constant 0 : i32
    %c0_i32_1 = arith.constant 0 : i32
    return %c0_i32, %c0_i32_0 : i32, i32
  }
  func.func @transform_2(%arg0: i32) -> (i32, i32) {
    %c0_i32 = arith.constant 0 : i32
    %c0_i32_0 = arith.constant 0 : i32
    %c0_i32_1 = arith.constant 0 : i32
    return %c0_i32, %c0_i32_0 : i32, i32
  }
  func.func @transform_3(%arg0: i32) -> (i32, i32) {
    %c0_i32 = arith.constant 0 : i32
    %c0_i32_0 = arith.constant 0 : i32
    return %arg0, %c0_i32 : i32, i32
  }
}

module attributes {stable_mosaic.version = 11 : i64} {
  func.func @_linear_kernel(%arg0: i32, %arg1: memref<18x512xbf16, #tpu.memory_space<vmem>>, %arg2: memref<512x128xbf16, #tpu.memory_space<vmem>>, %arg3: memref<1x128xf32, #tpu.memory_space<vmem>>, %arg4: memref<18x128xbf16, #tpu.memory_space<vmem>>) attributes {dimension_semantics = [#tpu.dimension_semantics<parallel>], iteration_bounds = array<i64: 1>, scalar_prefetch = 0 : i64, scratch_operands = 0 : i64, tpu.core_type = #tpu.core_type<tc>, window_params = [{transform_indices = @transform_0, window_bounds = array<i64: 18, 512>}, {pipeline_mode = #tpu.pipeline_mode<synchronous>, transform_indices = @transform_1, window_bounds = array<i64: 512, 128>}, {pipeline_mode = #tpu.pipeline_mode<synchronous>, transform_indices = @transform_2, window_bounds = array<i64: 1, 128>}, {transform_indices = @transform_3, window_bounds = array<i64: 18, 128>}]} {
    %c0 = arith.constant 0 : index
    %c0_0 = arith.constant 0 : index
    %0 = vector.load %arg1[%c0, %c0_0] : memref<18x512xbf16, #tpu.memory_space<vmem>>, vector<18x512xbf16>
    %c0_1 = arith.constant 0 : index
    %c0_2 = arith.constant 0 : index
    %1 = vector.load %arg2[%c0_1, %c0_2] : memref<512x128xbf16, #tpu.memory_space<vmem>>, vector<512x128xbf16>
    %cst = arith.constant dense<0.000000e+00> : vector<18x128xf32>
    %2 = tpu.matmul %0, %1, %cst {dimension_numbers = #tpu.dot_dimension_numbers<[1], [0], [0], [1], [0, 0, 1, 1], [], []>} : vector<18x512xbf16>, vector<512x128xbf16>, vector<18x128xf32> -> vector<18x128xf32>
    %c0_3 = arith.constant 0 : index
    %c0_4 = arith.constant 0 : index
    %3 = vector.load %arg3[%c0_3, %c0_4] : memref<1x128xf32, #tpu.memory_space<vmem>>, vector<1x128xf32>
    %4 = vector.broadcast %3 : vector<1x128xf32> to vector<18x128xf32>
    %5 = arith.addf %2, %4 : vector<18x128xf32>
    %cst_5 = arith.constant 0.000000e+00 : f32
    %6 = vector.broadcast %cst_5 : f32 to vector<18x128xf32>
    %7 = arith.maximumf %5, %6 : vector<18x128xf32>
    %8 = arith.truncf %7 : vector<18x128xf32> to vector<18x128xbf16>
    %c0_6 = arith.constant 0 : index
    %c0_7 = arith.constant 0 : index
    %9 = vector.load %arg4[%c0_6, %c0_7] : memref<18x128xbf16, #tpu.memory_space<vmem>>, vector<18x128xbf16>
    tpu.vector_store %arg4[%c0_6, %c0_7], %8 {strides = array<i32>} : memref<18x128xbf16, #tpu.memory_space<vmem>>, vector<18x128xbf16>,
    return
  }
  func.func @transform_0(%arg0: i32) -> (i32, i32) {
    %c0_i32 = arith.constant 0 : i32
    %c0_i32_0 = arith.constant 0 : i32
    return %arg0, %c0_i32 : i32, i32
  }
  func.func @transform_1(%arg0: i32) -> (i32, i32) {
    %c0_i32 = arith.constant 0 : i32
    %c0_i32_0 = arith.constant 0 : i32
    %c0_i32_1 = arith.constant 0 : i32
    return %c0_i32, %c0_i32_0 : i32, i32
  }
  func.func @transform_2(%arg0: i32) -> (i32, i32) {
    %c0_i32 = arith.constant 0 : i32
    %c0_i32_0 = arith.constant 0 : i32
    %c0_i32_1 = arith.constant 0 : i32
    return %c0_i32, %c0_i32_0 : i32, i32
  }
  func.func @transform_3(%arg0: i32) -> (i32, i32) {
    %c0_i32 = arith.constant 0 : i32
    %c0_i32_0 = arith.constant 0 : i32
    return %arg0, %c0_i32 : i32, i32
  }
}

module attributes {stable_mosaic.version = 11 : i64} {
  func.func @_linear_kernel(%arg0: i32, %arg1: memref<2x640xbf16, #tpu.memory_space<vmem>>, %arg2: memref<640x128xbf16, #tpu.memory_space<vmem>>, %arg3: memref<1x128xf32, #tpu.memory_space<vmem>>, %arg4: memref<2x128xbf16, #tpu.memory_space<vmem>>) attributes {dimension_semantics = [#tpu.dimension_semantics<parallel>], iteration_bounds = array<i64: 1>, scalar_prefetch = 0 : i64, scratch_operands = 0 : i64, tpu.core_type = #tpu.core_type<tc>, window_params = [{transform_indices = @transform_0, window_bounds = array<i64: 2, 640>}, {pipeline_mode = #tpu.pipeline_mode<synchronous>, transform_indices = @transform_1, window_bounds = array<i64: 640, 128>}, {pipeline_mode = #tpu.pipeline_mode<synchronous>, transform_indices = @transform_2, window_bounds = array<i64: 1, 128>}, {transform_indices = @transform_3, window_bounds = array<i64: 2, 128>}]} {
    %c0 = arith.constant 0 : index
    %c0_0 = arith.constant 0 : index
    %0 = vector.load %arg1[%c0, %c0_0] : memref<2x640xbf16, #tpu.memory_space<vmem>>, vector<2x640xbf16>
    %c0_1 = arith.constant 0 : index
    %c0_2 = arith.constant 0 : index
    %1 = vector.load %arg2[%c0_1, %c0_2] : memref<640x128xbf16, #tpu.memory_space<vmem>>, vector<640x128xbf16>
    %cst = arith.constant dense<0.000000e+00> : vector<2x128xf32>
    %2 = tpu.matmul %0, %1, %cst {dimension_numbers = #tpu.dot_dimension_numbers<[1], [0], [0], [1], [0, 0, 1, 1], [], []>} : vector<2x640xbf16>, vector<640x128xbf16>, vector<2x128xf32> -> vector<2x128xf32>
    %c0_3 = arith.constant 0 : index
    %c0_4 = arith.constant 0 : index
    %3 = vector.load %arg3[%c0_3, %c0_4] : memref<1x128xf32, #tpu.memory_space<vmem>>, vector<1x128xf32>
    %4 = vector.broadcast %3 : vector<1x128xf32> to vector<2x128xf32>
    %5 = arith.addf %2, %4 : vector<2x128xf32>
    %cst_5 = arith.constant 0.000000e+00 : f32
    %6 = vector.broadcast %cst_5 : f32 to vector<2x128xf32>
    %7 = arith.maximumf %5, %6 : vector<2x128xf32>
    %8 = arith.truncf %7 : vector<2x128xf32> to vector<2x128xbf16>
    %c0_6 = arith.constant 0 : index
    %c0_7 = arith.constant 0 : index
    %9 = vector.load %arg4[%c0_6, %c0_7] : memref<2x128xbf16, #tpu.memory_space<vmem>>, vector<2x128xbf16>
    tpu.vector_store %arg4[%c0_6, %c0_7], %8 {strides = array<i32>} : memref<2x128xbf16, #tpu.memory_space<vmem>>, vector<2x128xbf16>,
    return
  }
  func.func @transform_0(%arg0: i32) -> (i32, i32) {
    %c0_i32 = arith.constant 0 : i32
    %c0_i32_0 = arith.constant 0 : i32
    return %arg0, %c0_i32 : i32, i32
  }
  func.func @transform_1(%arg0: i32) -> (i32, i32) {
    %c0_i32 = arith.constant 0 : i32
    %c0_i32_0 = arith.constant 0 : i32
    %c0_i32_1 = arith.constant 0 : i32
    return %c0_i32, %c0_i32_0 : i32, i32
  }
  func.func @transform_2(%arg0: i32) -> (i32, i32) {
    %c0_i32 = arith.constant 0 : i32
    %c0_i32_0 = arith.constant 0 : i32
    %c0_i32_1 = arith.constant 0 : i32
    return %c0_i32, %c0_i32_0 : i32, i32
  }
  func.func @transform_3(%arg0: i32) -> (i32, i32) {
    %c0_i32 = arith.constant 0 : i32
    %c0_i32_0 = arith.constant 0 : i32
    return %arg0, %c0_i32 : i32, i32
  }
}

module attributes {stable_mosaic.version = 11 : i64} {
  func.func @_mlp_head_kernel(%arg0: i32, %arg1: memref<2x128xbf16, #tpu.memory_space<vmem>>, %arg2: memref<128x512xbf16, #tpu.memory_space<vmem>>, %arg3: memref<1x512xf32, #tpu.memory_space<vmem>>, %arg4: memref<512x128xbf16, #tpu.memory_space<vmem>>, %arg5: memref<1x128xf32, #tpu.memory_space<vmem>>, %arg6: memref<2x128xf32, #tpu.memory_space<vmem>>) attributes {dimension_semantics = [#tpu.dimension_semantics<parallel>], iteration_bounds = array<i64: 1>, scalar_prefetch = 0 : i64, scratch_operands = 0 : i64, tpu.core_type = #tpu.core_type<tc>, window_params = [{transform_indices = @transform_0, window_bounds = array<i64: 2, 128>}, {pipeline_mode = #tpu.pipeline_mode<synchronous>, transform_indices = @transform_1, window_bounds = array<i64: 128, 512>}, {pipeline_mode = #tpu.pipeline_mode<synchronous>, transform_indices = @transform_2, window_bounds = array<i64: 1, 512>}, {pipeline_mode = #tpu.pipeline_mode<synchronous>, transform_indices = @transform_3, window_bounds = array<i64: 512, 128>}, {pipeline_mode = #tpu.pipeline_mode<synchronous>, transform_indices = @transform_4, window_bounds = array<i64: 1, 128>}, {transform_indices = @transform_5, window_bounds = array<i64: 2, 128>}]} {
    %c0 = arith.constant 0 : index
    %c0_0 = arith.constant 0 : index
    %0 = vector.load %arg1[%c0, %c0_0] : memref<2x128xbf16, #tpu.memory_space<vmem>>, vector<2x128xbf16>
    %c0_1 = arith.constant 0 : index
    %c0_2 = arith.constant 0 : index
    %1 = vector.load %arg2[%c0_1, %c0_2] : memref<128x512xbf16, #tpu.memory_space<vmem>>, vector<128x512xbf16>
    %cst = arith.constant dense<0.000000e+00> : vector<2x512xf32>
    %2 = tpu.matmul %0, %1, %cst {dimension_numbers = #tpu.dot_dimension_numbers<[1], [0], [0], [1], [0, 0, 1, 1], [], []>} : vector<2x128xbf16>, vector<128x512xbf16>, vector<2x512xf32> -> vector<2x512xf32>
    %c0_3 = arith.constant 0 : index
    %c0_4 = arith.constant 0 : index
    %3 = vector.load %arg3[%c0_3, %c0_4] : memref<1x512xf32, #tpu.memory_space<vmem>>, vector<1x512xf32>
    %4 = vector.broadcast %3 : vector<1x512xf32> to vector<2x512xf32>
    %5 = arith.addf %2, %4 : vector<2x512xf32>
    %cst_5 = arith.constant 0.000000e+00 : f32
    %6 = vector.broadcast %cst_5 : f32 to vector<2x512xf32>
    %7 = arith.maximumf %5, %6 : vector<2x512xf32>
    %8 = arith.truncf %7 : vector<2x512xf32> to vector<2x512xbf16>
    %c0_6 = arith.constant 0 : index
    %c0_7 = arith.constant 0 : index
    %9 = vector.load %arg4[%c0_6, %c0_7] : memref<512x128xbf16, #tpu.memory_space<vmem>>, vector<512x128xbf16>
    %cst_8 = arith.constant dense<0.000000e+00> : vector<2x128xf32>
    %10 = tpu.matmul %8, %9, %cst_8 {dimension_numbers = #tpu.dot_dimension_numbers<[1], [0], [0], [1], [0, 0, 1, 1], [], []>} : vector<2x512xbf16>, vector<512x128xbf16>, vector<2x128xf32> -> vector<2x128xf32>
    %c0_9 = arith.constant 0 : index
    %c0_10 = arith.constant 0 : index
    %11 = vector.load %arg5[%c0_9, %c0_10] : memref<1x128xf32, #tpu.memory_space<vmem>>, vector<1x128xf32>
    %12 = vector.broadcast %11 : vector<1x128xf32> to vector<2x128xf32>
    %13 = arith.addf %10, %12 : vector<2x128xf32>
    %c0_11 = arith.constant 0 : index
    %c0_12 = arith.constant 0 : index
    %14 = vector.load %arg6[%c0_11, %c0_12] : memref<2x128xf32, #tpu.memory_space<vmem>>, vector<2x128xf32>
    tpu.vector_store %arg6[%c0_11, %c0_12], %13 {strides = array<i32>} : memref<2x128xf32, #tpu.memory_space<vmem>>, vector<2x128xf32>,
    return
  }
  func.func @transform_0(%arg0: i32) -> (i32, i32) {
    %c0_i32 = arith.constant 0 : i32
    %c0_i32_0 = arith.constant 0 : i32
    return %arg0, %c0_i32 : i32, i32
  }
  func.func @transform_1(%arg0: i32) -> (i32, i32) {
    %c0_i32 = arith.constant 0 : i32
    %c0_i32_0 = arith.constant 0 : i32
    %c0_i32_1 = arith.constant 0 : i32
    return %c0_i32, %c0_i32_0 : i32, i32
  }
  func.func @transform_2(%arg0: i32) -> (i32, i32) {
    %c0_i32 = arith.constant 0 : i32
    %c0_i32_0 = arith.constant 0 : i32
    %c0_i32_1 = arith.constant 0 : i32
    return %c0_i32, %c0_i32_0 : i32, i32
  }
  func.func @transform_3(%arg0: i32) -> (i32, i32) {
    %c0_i32 = arith.constant 0 : i32
    %c0_i32_0 = arith.constant 0 : i32
    %c0_i32_1 = arith.constant 0 : i32
    return %c0_i32, %c0_i32_0 : i32, i32
  }
  func.func @transform_4(%arg0: i32) -> (i32, i32) {
    %c0_i32 = arith.constant 0 : i32
    %c0_i32_0 = arith.constant 0 : i32
    %c0_i32_1 = arith.constant 0 : i32
    return %c0_i32, %c0_i32_0 : i32, i32
  }
  func.func @transform_5(%arg0: i32) -> (i32, i32) {
    %c0_i32 = arith.constant 0 : i32
    %c0_i32_0 = arith.constant 0 : i32
    return %arg0, %c0_i32 : i32, i32
  }
}

</mosaic_0001>

<llo_original>
// kernel: actor_critic_forward.4
$region0: #{actor_critic_forward.4}
  #allocation0 [shape = 'u32[]', space=smem, size = 0x4, offset = 0x4, fixed_abs, tag = 'smem constant byte address 0x4 - core index']
  #allocation1 [shape = 'u32[144,128]{1,0:T(1,128)}', space=vmem, size = 0x12000, scoped, tag = 'internal scratch']
  %s0 = inlined_call_operand.vmem [shape: bf16[128,256], index: 0, kind: input, shape index: {}]
  %s1 = inlined_call_operand.vmem [shape: bf16[256,128], index: 1, kind: input, shape index: {}]
  %s2 = inlined_call_operand.vmem [shape: f32[1,128], index: 2, kind: input, shape index: {}]
  %s3 = inlined_call_operand.vmem [shape: bf16[128,128], index: 3, kind: output, shape index: {}]
  %s4 = sld [smem:[#allocation0]]
  $region22: #{actor_critic_forward.4} parent=0
    _
  %s6 = ssub.s32 1, %s4
  %s7 = scalar_select 0, %s6, %s4
  // Predicated region
  $region2: #{actor_critic_forward.4} parent=0 // pred_check
    _
  $region3: #{actor_critic_forward.4} parent=0 // pred_check_branch
    %9 = sbr.rel (0) target = $region5
  $region4: #{actor_critic_forward.4} parent=0 // pred_region
    _
  $region5: #{actor_critic_forward.4} parent=0 // pred_fallthru
    _
  // Predicated region
  $region6: #{actor_critic_forward.4} parent=0 // pred_check
    _
  $region7: #{actor_critic_forward.4} parent=0 // pred_check_branch
    %11 = sbr.rel (0) target = $region9
  $region8: #{actor_critic_forward.4} parent=0 // pred_region
    _
  $region9: #{actor_critic_forward.4} parent=0 // pred_fallthru
    _
  // Predicated region
  $region10: #{actor_critic_forward.4} parent=0 // pred_check
    _
  $region11: #{actor_critic_forward.4} parent=0 // pred_check_branch
    %13 = sbr.rel (0) target = $region13
  $region12: #{actor_critic_forward.4} parent=0 // pred_region
    _
  $region13: #{actor_critic_forward.4} parent=0 // pred_fallthru
    _
  %v15 = vld [vmem:[%s0] sm:$0xff]
  %v16 = vld [vmem:[%s0 + $0x8] sm:$0xff]
  %v17 = vld [vmem:[%s0 + $0x10] sm:$0xff]
  %v18 = vld [vmem:[%s0 + $0x18] sm:$0xff]
  %v19 = vld [vmem:[%s0 + $0x20] sm:$0xff]
  %v20 = vld [vmem:[%s0 + $0x28] sm:$0xff]
  %v21 = vld [vmem:[%s0 + $0x30] sm:$0xff]
  %v22 = vld [vmem:[%s0 + $0x38] sm:$0xff]
  %v23 = vld [vmem:[%s0 + $0x40] sm:$0xff]
  %v24 = vld [vmem:[%s0 + $0x48] sm:$0xff]
  %v25 = vld [vmem:[%s0 + $0x50] sm:$0xff]
  %v26 = vld [vmem:[%s0 + $0x58] sm:$0xff]
  %v27 = vld [vmem:[%s0 + $0x60] sm:$0xff]
  %v28 = vld [vmem:[%s0 + $0x68] sm:$0xff]
  %v29 = vld [vmem:[%s0 + $0x70] sm:$0xff]
  %v30 = vld [vmem:[%s0 + $0x78] sm:$0xff]
  %v31 = vld [vmem:[%s1] sm:$0xf]
  %v32 = vld [vmem:[%s1 + $0x4] sm:$0xf]
  %v33 = vld [vmem:[%s1 + $0x8] sm:$0xf]
  %v34 = vld [vmem:[%s1 + $0xc] sm:$0xf]
  %v35 = vld [vmem:[%s1 + $0x10] sm:$0xf]
  %v36 = vld [vmem:[%s1 + $0x14] sm:$0xf]
  %v37 = vld [vmem:[%s1 + $0x18] sm:$0xf]
  %v38 = vld [vmem:[%s1 + $0x1c] sm:$0xf]
  %v39 = vld [vmem:[%s1 + $0x20] sm:$0xf]
  %v40 = vld [vmem:[%s1 + $0x24] sm:$0xf]
  %v41 = vld [vmem:[%s1 + $0x28] sm:$0xf]
  %v42 = vld [vmem:[%s1 + $0x2c] sm:$0xf]
  %v43 = vld [vmem:[%s1 + $0x30] sm:$0xf]
  %v44 = vld [vmem:[%s1 + $0x34] sm:$0xf]
  %v45 = vld [vmem:[%s1 + $0x38] sm:$0xf]
  %v46 = vld [vmem:[%s1 + $0x3c] sm:$0xf]
  %v47 = vld [vmem:[%s1 + $0x40] sm:$0xf]
  %v48 = vld [vmem:[%s1 + $0x44] sm:$0xf]
  %v49 = vld [vmem:[%s1 + $0x48] sm:$0xf]
  %v50 = vld [vmem:[%s1 + $0x4c] sm:$0xf]
  %v51 = vld [vmem:[%s1 + $0x50] sm:$0xf]
  %v52 = vld [vmem:[%s1 + $0x54] sm:$0xf]
  %v53 = vld [vmem:[%s1 + $0x58] sm:$0xf]
  %v54 = vld [vmem:[%s1 + $0x5c] sm:$0xf]
  %v55 = vld [vmem:[%s1 + $0x60] sm:$0xf]
  %v56 = vld [vmem:[%s1 + $0x64] sm:$0xf]
  %v57 = vld [vmem:[%s1 + $0x68] sm:$0xf]
  %v58 = vld [vmem:[%s1 + $0x6c] sm:$0xf]
  %v59 = vld [vmem:[%s1 + $0x70] sm:$0xf]
  %v60 = vld [vmem:[%s1 + $0x74] sm:$0xf]
  %v61 = vld [vmem:[%s1 + $0x78] sm:$0xf]
  %v62 = vld [vmem:[%s1 + $0x7c] sm:$0xf]
  %v63 = vld [vmem:[%s2] sm:$0x1]
  %v65 = vlaneseq
  %v66 = vshrl.u32 %v65, 7
  %v67 = vsub.s32 0, %v66
  %v68 = vrot.slane %v63, %v67
  %v86 = vunpack.c.l.b16 %v15
  %v87 = vunpack.c.h.b16 %v15
  %v88 = vunpack.c.l.b16 %v16
  %v89 = vunpack.c.h.b16 %v16
  %v90 = vunpack.c.l.b16 %v17
  %v91 = vunpack.c.h.b16 %v17
  %v92 = vunpack.c.l.b16 %v18
  %v93 = vunpack.c.h.b16 %v18
  %v94 = vunpack.c.l.b16 %v19
  %v95 = vunpack.c.h.b16 %v19
  %v96 = vunpack.c.l.b16 %v20
  %v97 = vunpack.c.h.b16 %v20
  %v98 = vunpack.c.l.b16 %v21
  %v99 = vunpack.c.h.b16 %v21
  %v100 = vunpack.c.l.b16 %v22
  %v101 = vunpack.c.h.b16 %v22
  %v102 = vunpack.c.l.b16 %v23
  %v103 = vunpack.c.h.b16 %v23
  %v104 = vunpack.c.l.b16 %v24
  %v105 = vunpack.c.h.b16 %v24
  %v106 = vunpack.c.l.b16 %v25
  %v107 = vunpack.c.h.b16 %v25
  %v108 = vunpack.c.l.b16 %v26
  %v109 = vunpack.c.h.b16 %v26
  %v110 = vunpack.c.l.b16 %v27
  %v111 = vunpack.c.h.b16 %v27
  %v112 = vunpack.c.l.b16 %v28
  %v113 = vunpack.c.h.b16 %v28
  %v114 = vunpack.c.l.b16 %v29
  %v115 = vunpack.c.h.b16 %v29
  %v116 = vunpack.c.l.b16 %v30
  %v117 = vunpack.c.h.b16 %v30
  %v118 = vpack.c.b16 %v88, %v86
  %v119 = vpack.c.b16 %v89, %v87
  %v120 = vpack.c.b16 %v92, %v90
  %v121 = vpack.c.b16 %v93, %v91
  %v122 = vpack.c.b16 %v96, %v94
  %v123 = vpack.c.b16 %v97, %v95
  %v124 = vpack.c.b16 %v100, %v98
  %v125 = vpack.c.b16 %v101, %v99
  %v126 = vpack.c.b16 %v104, %v102
  %v127 = vpack.c.b16 %v105, %v103
  %v128 = vpack.c.b16 %v108, %v106
  %v129 = vpack.c.b16 %v109, %v107
  %v130 = vpack.c.b16 %v112, %v110
  %v131 = vpack.c.b16 %v113, %v111
  %v132 = vpack.c.b16 %v116, %v114
  %v133 = vpack.c.b16 %v117, %v115
  %v182 = vunpack.c.l.b16 %v31
  %v183 = vunpack.c.l.b16 %v32
  %v184 = vunpack.c.l.b16 %v33
  %v185 = vunpack.c.l.b16 %v34
  %v186 = vunpack.c.l.b16 %v35
  %v187 = vunpack.c.l.b16 %v36
  %v188 = vunpack.c.l.b16 %v37
  %v189 = vunpack.c.l.b16 %v38
  %v190 = vunpack.c.l.b16 %v39
  %v191 = vunpack.c.l.b16 %v40
  %v192 = vunpack.c.l.b16 %v41
  %v193 = vunpack.c.l.b16 %v42
  %v194 = vunpack.c.l.b16 %v43
  %v195 = vunpack.c.l.b16 %v44
  %v196 = vunpack.c.l.b16 %v45
  %v197 = vunpack.c.l.b16 %v46
  %v198 = vunpack.c.l.b16 %v47
  %v199 = vunpack.c.l.b16 %v48
  %v200 = vunpack.c.l.b16 %v49
  %v201 = vunpack.c.l.b16 %v50
  %v202 = vunpack.c.l.b16 %v51
  %v203 = vunpack.c.l.b16 %v52
  %v204 = vunpack.c.l.b16 %v53
  %v205 = vunpack.c.l.b16 %v54
  %v206 = vunpack.c.l.b16 %v55
  %v207 = vunpack.c.l.b16 %v56
  %v208 = vunpack.c.l.b16 %v57
  %v209 = vunpack.c.l.b16 %v58
  %v210 = vunpack.c.l.b16 %v59
  %v211 = vunpack.c.l.b16 %v60
  %v212 = vunpack.c.l.b16 %v61
  %v213 = vunpack.c.l.b16 %v62
  %v214 = vpack.c.b16 %v183, %v182
  %v215 = vpack.c.b16 %v185, %v184
  %v216 = vpack.c.b16 %v187, %v186
  %v217 = vpack.c.b16 %v189, %v188
  %v218 = vpack.c.b16 %v191, %v190
  %v219 = vpack.c.b16 %v193, %v192
  %v220 = vpack.c.b16 %v195, %v194
  %v221 = vpack.c.b16 %v197, %v196
  %v222 = vpack.c.b16 %v199, %v198
  %v223 = vpack.c.b16 %v201, %v200
  %v224 = vpack.c.b16 %v203, %v202
  %v225 = vpack.c.b16 %v205, %v204
  %v226 = vpack.c.b16 %v207, %v206
  %v227 = vpack.c.b16 %v209, %v208
  %v228 = vpack.c.b16 %v211, %v210
  %v229 = vpack.c.b16 %v213, %v212
  %246 = vmatprep.subr.bf16.mxu0 0
  %247 = vmatpush1.bf16.msra.mxu0 %v221
  %248 = vmatprep.subr.bf16.mxu0 0
  %249 = vmatpush1.bf16.msra.mxu0 %v220
  %250 = vmatprep.subr.bf16.mxu0 0
  %251 = vmatpush1.bf16.msra.mxu0 %v219
  %252 = vmatprep.subr.bf16.mxu0 0
  %253 = vmatpush1.bf16.msra.mxu0 %v218
  %254 = vmatprep.subr.bf16.mxu0 0
  %255 = vmatpush1.bf16.msra.mxu0 %v217
  %256 = vmatprep.subr.bf16.mxu0 0
  %257 = vmatpush1.bf16.msra.mxu0 %v216
  %258 = vmatprep.subr.bf16.mxu0 0
  %259 = vmatpush1.bf16.msra.mxu0 %v215
  %260 = vmatprep.subr.bf16.mxu0 0
  %261 = vmatpush1.bf16.msra.mxu0 %v214
  %262 = vmatprep.subr.bf16.mxu0 0
  %263 = vmatpush2.bf16.msra.mxu0 %v229
  %264 = vmatprep.subr.bf16.mxu0 0
  %265 = vmatpush2.bf16.msra.mxu0 %v228
  %266 = vmatprep.subr.bf16.mxu0 0
  %267 = vmatpush2.bf16.msra.mxu0 %v227
  %268 = vmatprep.subr.bf16.mxu0 0
  %269 = vmatpush2.bf16.msra.mxu0 %v226
  %270 = vmatprep.subr.bf16.mxu0 0
  %271 = vmatpush2.bf16.msra.mxu0 %v225
  %272 = vmatprep.subr.bf16.mxu0 0
  %273 = vmatpush2.bf16.msra.mxu0 %v224
  %274 = vmatprep.subr.bf16.mxu0 0
  %275 = vmatpush2.bf16.msra.mxu0 %v223
  %276 = vmatprep.subr.bf16.mxu0 0
  %277 = vmatpush2.bf16.msra.mxu0 %v222
  %278 = vmatprep.mubr.bf16.mxu0 %v119
  %279 = vmatmul.mubr.bf16.gmra.mxu0 %v118
  %v280 = vpop.f32.mrf.mxu0
  %v281 = vadd.f32 %v68, %v280
  %v282 = vpop.f32.mrf.mxu0
  %v283 = vpop.f32.mrf.mxu0
  %v284 = vadd.f32 %v68, %v283
  %v285 = vpop.f32.mrf.mxu0
  %286 = vmatprep.mubr.bf16.mxu0 %v121
  %287 = vmatmul.mubr.bf16.gmra.mxu0 %v120
  %v288 = vpop.f32.mrf.mxu0
  %v289 = vadd.f32 %v68, %v288
  %v290 = vpop.f32.mrf.mxu0
  %v291 = vpop.f32.mrf.mxu0
  %v292 = vadd.f32 %v68, %v291
  %v293 = vpop.f32.mrf.mxu0
  %294 = vmatprep.mubr.bf16.mxu0 %v123
  %295 = vmatmul.mubr.bf16.gmra.mxu0 %v122
  %v296 = vpop.f32.mrf.mxu0
  %v297 = vadd.f32 %v68, %v296
  %v298 = vpop.f32.mrf.mxu0
  %v299 = vpop.f32.mrf.mxu0
  %v300 = vadd.f32 %v68, %v299
  %v301 = vpop.f32.mrf.mxu0
  %302 = vmatprep.mubr.bf16.mxu0 %v125
  %303 = vmatmul.mubr.bf16.gmra.mxu0 %v124
  %v304 = vpop.f32.mrf.mxu0
  %v305 = vadd.f32 %v68, %v304
  %v306 = vpop.f32.mrf.mxu0
  %v307 = vpop.f32.mrf.mxu0
  %v308 = vadd.f32 %v68, %v307
  %v309 = vpop.f32.mrf.mxu0
  %310 = vmatprep.mubr.bf16.mxu0 %v127
  %311 = vmatmul.mubr.bf16.gmra.mxu0 %v126
  %v312 = vpop.f32.mrf.mxu0
  %v313 = vadd.f32 %v68, %v312
  %v314 = vpop.f32.mrf.mxu0
  %v315 = vpop.f32.mrf.mxu0
  %v316 = vadd.f32 %v68, %v315
  %v317 = vpop.f32.mrf.mxu0
  %318 = vmatprep.mubr.bf16.mxu0 %v129
  %319 = vmatmul.mubr.bf16.gmra.mxu0 %v128
  %v320 = vpop.f32.mrf.mxu0
  %v321 = vadd.f32 %v68, %v320
  %v322 = vpop.f32.mrf.mxu0
  %v323 = vpop.f32.mrf.mxu0
  %v324 = vadd.f32 %v68, %v323
  %v325 = vpop.f32.mrf.mxu0
  %326 = vmatprep.mubr.bf16.mxu0 %v131
  %327 = vmatmul.mubr.bf16.gmra.mxu0 %v130
  %v328 = vpop.f32.mrf.mxu0
  %v329 = vadd.f32 %v68, %v328
  %v330 = vpop.f32.mrf.mxu0
  %v331 = vpop.f32.mrf.mxu0
  %v332 = vadd.f32 %v68, %v331
  %v333 = vpop.f32.mrf.mxu0
  %334 = vmatprep.mubr.bf16.mxu0 %v133
  %335 = vmatmul.mubr.bf16.gmra.mxu0 %v132
  %v336 = vpop.f32.mrf.mxu0
  %v337 = vadd.f32 %v68, %v336
  %v338 = vpop.f32.mrf.mxu0
  %v339 = vpop.f32.mrf.mxu0
  %v340 = vadd.f32 %v68, %v339
  %v341 = vpop.f32.mrf.mxu0
  %342 = vdwg.mxu0
  %v343 = vmax.f32 %v281, 0.0
  %v344 = vmax.f32 %v284, 0.0
  %v345 = vmax.f32 %v289, 0.0
  %v346 = vmax.f32 %v292, 0.0
  %v347 = vmax.f32 %v297, 0.0
  %v348 = vmax.f32 %v300, 0.0
  %v349 = vmax.f32 %v305, 0.0
  %v350 = vmax.f32 %v308, 0.0
  %v351 = vmax.f32 %v313, 0.0
  %v352 = vmax.f32 %v316, 0.0
  %v353 = vmax.f32 %v321, 0.0
  %v354 = vmax.f32 %v324, 0.0
  %v355 = vmax.f32 %v329, 0.0
  %v356 = vmax.f32 %v332, 0.0
  %v357 = vmax.f32 %v337, 0.0
  %v358 = vmax.f32 %v340, 0.0
  %v359 = vpack.c.bf16 %v344, %v343
  %v360 = vpack.c.bf16 %v346, %v345
  %v361 = vpack.c.bf16 %v348, %v347
  %v362 = vpack.c.bf16 %v350, %v349
  %v363 = vpack.c.bf16 %v352, %v351
  %v364 = vpack.c.bf16 %v354, %v353
  %v365 = vpack.c.bf16 %v356, %v355
  %v366 = vpack.c.bf16 %v358, %v357
  %v375 = vunpack.c.l.b16 %v359
  %v376 = vunpack.c.h.b16 %v359
  %v377 = vunpack.c.l.b16 %v360
  %v378 = vunpack.c.h.b16 %v360
  %v379 = vunpack.c.l.b16 %v361
  %v380 = vunpack.c.h.b16 %v361
  %v381 = vunpack.c.l.b16 %v362
  %v382 = vunpack.c.h.b16 %v362
  %v383 = vunpack.c.l.b16 %v363
  %v384 = vunpack.c.h.b16 %v363
  %v385 = vunpack.c.l.b16 %v364
  %v386 = vunpack.c.h.b16 %v364
  %v387 = vunpack.c.l.b16 %v365
  %v388 = vunpack.c.h.b16 %v365
  %v389 = vunpack.c.l.b16 %v366
  %v390 = vunpack.c.h.b16 %v366
  %v391 = vpack.c.b16 %v375, %v375
  %v392 = vpack.c.b16 %v376, %v376
  %v393 = vpack.c.b16 %v377, %v377
  %v394 = vpack.c.b16 %v378, %v378
  %v395 = vpack.c.b16 %v379, %v379
  %v396 = vpack.c.b16 %v380, %v380
  %v397 = vpack.c.b16 %v381, %v381
  %v398 = vpack.c.b16 %v382, %v382
  %v399 = vpack.c.b16 %v383, %v383
  %v400 = vpack.c.b16 %v384, %v384
  %v401 = vpack.c.b16 %v385, %v385
  %v402 = vpack.c.b16 %v386, %v386
  %v403 = vpack.c.b16 %v387, %v387
  %v404 = vpack.c.b16 %v388, %v388
  %v405 = vpack.c.b16 %v389, %v389
  %v406 = vpack.c.b16 %v390, %v390
  %423 = vst [vmem:[%s3] sm:$0xf] %v391
  %424 = vst [vmem:[%s3 + $0x4] sm:$0xf] %v392
  %425 = vst [vmem:[%s3 + $0x8] sm:$0xf] %v393
  %426 = vst [vmem:[%s3 + $0xc] sm:$0xf] %v394
  %427 = vst [vmem:[%s3 + $0x10] sm:$0xf] %v395
  %428 = vst [vmem:[%s3 + $0x14] sm:$0xf] %v396
  %429 = vst [vmem:[%s3 + $0x18] sm:$0xf] %v397
  %430 = vst [vmem:[%s3 + $0x1c] sm:$0xf] %v398
  %431 = vst [vmem:[%s3 + $0x20] sm:$0xf] %v399
  %432 = vst [vmem:[%s3 + $0x24] sm:$0xf] %v400
  %433 = vst [vmem:[%s3 + $0x28] sm:$0xf] %v401
  %434 = vst [vmem:[%s3 + $0x2c] sm:$0xf] %v402
  %435 = vst [vmem:[%s3 + $0x30] sm:$0xf] %v403
  %436 = vst [vmem:[%s3 + $0x34] sm:$0xf] %v404
  %437 = vst [vmem:[%s3 + $0x38] sm:$0xf] %v405
  %438 = vst [vmem:[%s3 + $0x3c] sm:$0xf] %v406
  // Predicated region
  $region14: #{actor_critic_forward.4} parent=0 // pred_check
    _
  $region15: #{actor_critic_forward.4} parent=0 // pred_check_branch
    %440 = sbr.rel (0) target = $region17
  $region16: #{actor_critic_forward.4} parent=0 // pred_region
    _
  $region17: #{actor_critic_forward.4} parent=0 // pred_fallthru
    _
  // Predicated region
  $region18: #{actor_critic_forward.4} parent=0 // pred_check
    _
  $region19: #{actor_critic_forward.4} parent=0 // pred_check_branch
    %442 = sbr.rel (0) target = $region21
  $region20: #{actor_critic_forward.4} parent=0 // pred_region
    _
  $region21: #{actor_critic_forward.4} parent=0 // pred_fallthru
    _

// kernel: actor_critic_forward.5
$region0: #{actor_critic_forward.5}
  #allocation0 [shape = 'u32[]', space=smem, size = 0x4, offset = 0x4, fixed_abs, tag = 'smem constant byte address 0x4 - core index']
  #allocation1 [shape = 'u32[144,128]{1,0:T(1,128)}', space=vmem, size = 0x12000, scoped, tag = 'internal scratch']
  %s0 = inlined_call_operand.vmem [shape: bf16[18,512], index: 0, kind: input, shape index: {}]
  %s1 = inlined_call_operand.vmem [shape: bf16[512,128], index: 1, kind: input, shape index: {}]
  %s2 = inlined_call_operand.vmem [shape: f32[1,128], index: 2, kind: input, shape index: {}]
  %s3 = inlined_call_operand.vmem [shape: bf16[18,128], index: 3, kind: output, shape index: {}]
  %s4 = sld [smem:[#allocation0]]
  $region22: #{actor_critic_forward.5} parent=0
    _
  %s6 = ssub.s32 1, %s4
  %s7 = scalar_select 0, %s6, %s4
  // Predicated region
  $region2: #{actor_critic_forward.5} parent=0 // pred_check
    _
  $region3: #{actor_critic_forward.5} parent=0 // pred_check_branch
    %9 = sbr.rel (0) target = $region5
  $region4: #{actor_critic_forward.5} parent=0 // pred_region
    _
  $region5: #{actor_critic_forward.5} parent=0 // pred_fallthru
    _
  // Predicated region
  $region6: #{actor_critic_forward.5} parent=0 // pred_check
    _
  $region7: #{actor_critic_forward.5} parent=0 // pred_check_branch
    %11 = sbr.rel (0) target = $region9
  $region8: #{actor_critic_forward.5} parent=0 // pred_region
    _
  $region9: #{actor_critic_forward.5} parent=0 // pred_fallthru
    _
  // Predicated region
  $region10: #{actor_critic_forward.5} parent=0 // pred_check
    _
  $region11: #{actor_critic_forward.5} parent=0 // pred_check_branch
    %13 = sbr.rel (0) target = $region13
  $region12: #{actor_critic_forward.5} parent=0 // pred_region
    _
  $region13: #{actor_critic_forward.5} parent=0 // pred_fallthru
    _
  %v15 = vld [vmem:[%s0] sm:$0xff]
  %v16 = vld [vmem:[%s0 + $0x8] sm:$0xff]
  %v17 = vld [vmem:[%s0 + $0x10] sm:$0xff]
  %v18 = vld [vmem:[%s0 + $0x18] sm:$0xff]
  %v19 = vld [vmem:[%s0 + $0x20] sm:$0x11]
  %v20 = vld [vmem:[%s0 + $0x28] sm:$0x11]
  %v21 = vld [vmem:[%s1] sm:$0xf]
  %v22 = vld [vmem:[%s1 + $0x4] sm:$0xf]
  %v23 = vld [vmem:[%s1 + $0x8] sm:$0xf]
  %v24 = vld [vmem:[%s1 + $0xc] sm:$0xf]
  %v25 = vld [vmem:[%s1 + $0x10] sm:$0xf]
  %v26 = vld [vmem:[%s1 + $0x14] sm:$0xf]
  %v27 = vld [vmem:[%s1 + $0x18] sm:$0xf]
  %v28 = vld [vmem:[%s1 + $0x1c] sm:$0xf]
  %v29 = vld [vmem:[%s1 + $0x20] sm:$0xf]
  %v30 = vld [vmem:[%s1 + $0x24] sm:$0xf]
  %v31 = vld [vmem:[%s1 + $0x28] sm:$0xf]
  %v32 = vld [vmem:[%s1 + $0x2c] sm:$0xf]
  %v33 = vld [vmem:[%s1 + $0x30] sm:$0xf]
  %v34 = vld [vmem:[%s1 + $0x34] sm:$0xf]
  %v35 = vld [vmem:[%s1 + $0x38] sm:$0xf]
  %v36 = vld [vmem:[%s1 + $0x3c] sm:$0xf]
  %v37 = vld [vmem:[%s1 + $0x40] sm:$0xf]
  %v38 = vld [vmem:[%s1 + $0x44] sm:$0xf]
  %v39 = vld [vmem:[%s1 + $0x48] sm:$0xf]
  %v40 = vld [vmem:[%s1 + $0x4c] sm:$0xf]
  %v41 = vld [vmem:[%s1 + $0x50] sm:$0xf]
  %v42 = vld [vmem:[%s1 + $0x54] sm:$0xf]
  %v43 = vld [vmem:[%s1 + $0x58] sm:$0xf]
  %v44 = vld [vmem:[%s1 + $0x5c] sm:$0xf]
  %v45 = vld [vmem:[%s1 + $0x60] sm:$0xf]
  %v46 = vld [vmem:[%s1 + $0x64] sm:$0xf]
  %v47 = vld [vmem:[%s1 + $0x68] sm:$0xf]
  %v48 = vld [vmem:[%s1 + $0x6c] sm:$0xf]
  %v49 = vld [vmem:[%s1 + $0x70] sm:$0xf]
  %v50 = vld [vmem:[%s1 + $0x74] sm:$0xf]
  %v51 = vld [vmem:[%s1 + $0x78] sm:$0xf]
  %v52 = vld [vmem:[%s1 + $0x7c] sm:$0xf]
  %v53 = vld [vmem:[%s1 + $0x80] sm:$0xf]
  %v54 = vld [vmem:[%s1 + $0x84] sm:$0xf]
  %v55 = vld [vmem:[%s1 + $0x88] sm:$0xf]
  %v56 = vld [vmem:[%s1 + $0x8c] sm:$0xf]
  %v57 = vld [vmem:[%s1 + $0x90] sm:$0xf]
  %v58 = vld [vmem:[%s1 + $0x94] sm:$0xf]
  %v59 = vld [vmem:[%s1 + $0x98] sm:$0xf]
  %v60 = vld [vmem:[%s1 + $0x9c] sm:$0xf]
  %v61 = vld [vmem:[%s1 + $0xa0] sm:$0xf]
  %v62 = vld [vmem:[%s1 + $0xa4] sm:$0xf]
  %v63 = vld [vmem:[%s1 + $0xa8] sm:$0xf]
  %v64 = vld [vmem:[%s1 + $0xac] sm:$0xf]
  %v65 = vld [vmem:[%s1 + $0xb0] sm:$0xf]
  %v66 = vld [vmem:[%s1 + $0xb4] sm:$0xf]
  %v67 = vld [vmem:[%s1 + $0xb8] sm:$0xf]
  %v68 = vld [vmem:[%s1 + $0xbc] sm:$0xf]
  %v69 = vld [vmem:[%s1 + $0xc0] sm:$0xf]
  %v70 = vld [vmem:[%s1 + $0xc4] sm:$0xf]
  %v71 = vld [vmem:[%s1 + $0xc8] sm:$0xf]
  %v72 = vld [vmem:[%s1 + $0xcc] sm:$0xf]
  %v73 = vld [vmem:[%s1 + $0xd0] sm:$0xf]
  %v74 = vld [vmem:[%s1 + $0xd4] sm:$0xf]
  %v75 = vld [vmem:[%s1 + $0xd8] sm:$0xf]
  %v76 = vld [vmem:[%s1 + $0xdc] sm:$0xf]
  %v77 = vld [vmem:[%s1 + $0xe0] sm:$0xf]
  %v78 = vld [vmem:[%s1 + $0xe4] sm:$0xf]
  %v79 = vld [vmem:[%s1 + $0xe8] sm:$0xf]
  %v80 = vld [vmem:[%s1 + $0xec] sm:$0xf]
  %v81 = vld [vmem:[%s1 + $0xf0] sm:$0xf]
  %v82 = vld [vmem:[%s1 + $0xf4] sm:$0xf]
  %v83 = vld [vmem:[%s1 + $0xf8] sm:$0xf]
  %v84 = vld [vmem:[%s1 + $0xfc] sm:$0xf]
  %v85 = vld [vmem:[%s2] sm:$0x1]
  %v87 = vlaneseq
  %v88 = vshrl.u32 %v87, 7
  %v89 = vsub.s32 0, %v88
  %v90 = vrot.slane %v85, %v89
  %v98 = vunpack.c.l.b16 %v15
  %v99 = vunpack.c.h.b16 %v15
  %v100 = vunpack.c.l.b16 %v16
  %v101 = vunpack.c.h.b16 %v16
  %v102 = vunpack.c.l.b16 %v17
  %v103 = vunpack.c.h.b16 %v17
  %v104 = vunpack.c.l.b16 %v18
  %v105 = vunpack.c.h.b16 %v18
  %v106 = vunpack.c.l.b16 %v19
  %v107 = vunpack.c.h.b16 %v19
  %v108 = vunpack.c.l.b16 %v20
  %v109 = vunpack.c.h.b16 %v20
  %v110 = vpack.c.b16 %v102, %v98
  %v111 = vpack.c.b16 %v103, %v99
  %v112 = vpack.c.b16 %v104, %v100
  %v113 = vpack.c.b16 %v105, %v101
  %v114 = vpack.c.b16 %v106, %v106
  %v115 = vpack.c.b16 %v107, %v107
  %v116 = vpack.c.b16 %v108, %v108
  %v117 = vpack.c.b16 %v109, %v109
  %v190 = vunpack.c.l.b16 %v21
  %v191 = vunpack.c.l.b16 %v22
  %v192 = vunpack.c.l.b16 %v23
  %v193 = vunpack.c.l.b16 %v24
  %v194 = vunpack.c.l.b16 %v25
  %v195 = vunpack.c.l.b16 %v26
  %v196 = vunpack.c.l.b16 %v27
  %v197 = vunpack.c.l.b16 %v28
  %v198 = vunpack.c.l.b16 %v29
  %v199 = vunpack.c.l.b16 %v30
  %v200 = vunpack.c.l.b16 %v31
  %v201 = vunpack.c.l.b16 %v32
  %v202 = vunpack.c.l.b16 %v33
  %v203 = vunpack.c.l.b16 %v34
  %v204 = vunpack.c.l.b16 %v35
  %v205 = vunpack.c.l.b16 %v36
  %v206 = vunpack.c.l.b16 %v37
  %v207 = vunpack.c.l.b16 %v38
  %v208 = vunpack.c.l.b16 %v39
  %v209 = vunpack.c.l.b16 %v40
  %v210 = vunpack.c.l.b16 %v41
  %v211 = vunpack.c.l.b16 %v42
  %v212 = vunpack.c.l.b16 %v43
  %v213 = vunpack.c.l.b16 %v44
  %v214 = vunpack.c.l.b16 %v45
  %v215 = vunpack.c.l.b16 %v46
  %v216 = vunpack.c.l.b16 %v47
  %v217 = vunpack.c.l.b16 %v48
  %v218 = vunpack.c.l.b16 %v49
  %v219 = vunpack.c.l.b16 %v50
  %v220 = vunpack.c.l.b16 %v51
  %v221 = vunpack.c.l.b16 %v52
  %v222 = vunpack.c.l.b16 %v53
  %v223 = vunpack.c.l.b16 %v54
  %v224 = vunpack.c.l.b16 %v55
  %v225 = vunpack.c.l.b16 %v56
  %v226 = vunpack.c.l.b16 %v57
  %v227 = vunpack.c.l.b16 %v58
  %v228 = vunpack.c.l.b16 %v59
  %v229 = vunpack.c.l.b16 %v60
  %v230 = vunpack.c.l.b16 %v61
  %v231 = vunpack.c.l.b16 %v62
  %v232 = vunpack.c.l.b16 %v63
  %v233 = vunpack.c.l.b16 %v64
  %v234 = vunpack.c.l.b16 %v65
  %v235 = vunpack.c.l.b16 %v66
  %v236 = vunpack.c.l.b16 %v67
  %v237 = vunpack.c.l.b16 %v68
  %v238 = vunpack.c.l.b16 %v69
  %v239 = vunpack.c.l.b16 %v70
  %v240 = vunpack.c.l.b16 %v71
  %v241 = vunpack.c.l.b16 %v72
  %v242 = vunpack.c.l.b16 %v73
  %v243 = vunpack.c.l.b16 %v74
  %v244 = vunpack.c.l.b16 %v75
  %v245 = vunpack.c.l.b16 %v76
  %v246 = vunpack.c.l.b16 %v77
  %v247 = vunpack.c.l.b16 %v78
  %v248 = vunpack.c.l.b16 %v79
  %v249 = vunpack.c.l.b16 %v80
  %v250 = vunpack.c.l.b16 %v81
  %v251 = vunpack.c.l.b16 %v82
  %v252 = vunpack.c.l.b16 %v83
  %v253 = vunpack.c.l.b16 %v84
  %v254 = vpack.c.b16 %v191, %v190
  %v255 = vpack.c.b16 %v193, %v192
  %v256 = vpack.c.b16 %v195, %v194
  %v257 = vpack.c.b16 %v197, %v196
  %v258 = vpack.c.b16 %v199, %v198
  %v259 = vpack.c.b16 %v201, %v200
  %v260 = vpack.c.b16 %v203, %v202
  %v261 = vpack.c.b16 %v205, %v204
  %v262 = vpack.c.b16 %v207, %v206
  %v263 = vpack.c.b16 %v209, %v208
  %v264 = vpack.c.b16 %v211, %v210
  %v265 = vpack.c.b16 %v213, %v212
  %v266 = vpack.c.b16 %v215, %v214
  %v267 = vpack.c.b16 %v217, %v216
  %v268 = vpack.c.b16 %v219, %v218
  %v269 = vpack.c.b16 %v221, %v220
  %v270 = vpack.c.b16 %v223, %v222
  %v271 = vpack.c.b16 %v225, %v224
  %v272 = vpack.c.b16 %v227, %v226
  %v273 = vpack.c.b16 %v229, %v228
  %v274 = vpack.c.b16 %v231, %v230
  %v275 = vpack.c.b16 %v233, %v232
  %v276 = vpack.c.b16 %v235, %v234
  %v277 = vpack.c.b16 %v237, %v236
  %v278 = vpack.c.b16 %v239, %v238
  %v279 = vpack.c.b16 %v241, %v240
  %v280 = vpack.c.b16 %v243, %v242
  %v281 = vpack.c.b16 %v245, %v244
  %v282 = vpack.c.b16 %v247, %v246
  %v283 = vpack.c.b16 %v249, %v248
  %v284 = vpack.c.b16 %v251, %v250
  %v285 = vpack.c.b16 %v253, %v252
  %318 = vmatprep.subr.bf16.mxu0 0
  %319 = vmatpush1.bf16.msra.mxu0 %v261
  %320 = vmatprep.subr.bf16.mxu0 0
  %321 = vmatpush1.bf16.msra.mxu0 %v260
  %322 = vmatprep.subr.bf16.mxu0 0
  %323 = vmatpush1.bf16.msra.mxu0 %v259
  %324 = vmatprep.subr.bf16.mxu0 0
  %325 = vmatpush1.bf16.msra.mxu0 %v258
  %326 = vmatprep.subr.bf16.mxu0 0
  %327 = vmatpush1.bf16.msra.mxu0 %v257
  %328 = vmatprep.subr.bf16.mxu0 0
  %329 = vmatpush1.bf16.msra.mxu0 %v256
  %330 = vmatprep.subr.bf16.mxu0 0
  %331 = vmatpush1.bf16.msra.mxu0 %v255
  %332 = vmatprep.subr.bf16.mxu0 0
  %333 = vmatpush1.bf16.msra.mxu0 %v254
  %334 = vmatprep.subr.bf16.mxu0 0
  %335 = vmatpush2.bf16.msra.mxu0 %v269
  %336 = vmatprep.subr.bf16.mxu0 0
  %337 = vmatpush2.bf16.msra.mxu0 %v268
  %338 = vmatprep.subr.bf16.mxu0 0
  %339 = vmatpush2.bf16.msra.mxu0 %v267
  %340 = vmatprep.subr.bf16.mxu0 0
  %341 = vmatpush2.bf16.msra.mxu0 %v266
  %342 = vmatprep.subr.bf16.mxu0 0
  %343 = vmatpush2.bf16.msra.mxu0 %v265
  %344 = vmatprep.subr.bf16.mxu0 0
  %345 = vmatpush2.bf16.msra.mxu0 %v264
  %346 = vmatprep.subr.bf16.mxu0 0
  %347 = vmatpush2.bf16.msra.mxu0 %v263
  %348 = vmatprep.subr.bf16.mxu0 0
  %349 = vmatpush2.bf16.msra.mxu0 %v262
  %350 = vmatprep.mubr.bf16.mxu0 %v111
  %351 = vmatmul.mubr.bf16.gmra.mxu0 %v110
  %v352 = vpop.f32.mrf.mxu0
  %v353 = vadd.f32 %v90, %v352
  %v354 = vpop.f32.mrf.mxu0
  %v355 = vpop.f32.mrf.mxu0
  %v356 = vadd.f32 %v90, %v355
  %v357 = vpop.f32.mrf.mxu0
  %358 = vmatprep.mubr.bf16.mxu0 %v115
  %359 = vmatmul.mubr.bf16.gmra.mxu0 %v114
  %v360 = vpop.f32.mrf.mxu0
  %v361 = vadd.f32 %v90, %v360
  %v362 = vpop.f32.mrf.mxu0
  %v363 = vpop.f32.mrf.mxu0
  %v364 = vpop.f32.mrf.mxu0
  %365 = vdwg.mxu0
  %366 = vmatprep.subr.bf16.mxu0 0
  %367 = vmatpush1.bf16.msra.mxu0 %v277
  %368 = vmatprep.subr.bf16.mxu0 0
  %369 = vmatpush1.bf16.msra.mxu0 %v276
  %370 = vmatprep.subr.bf16.mxu0 0
  %371 = vmatpush1.bf16.msra.mxu0 %v275
  %372 = vmatprep.subr.bf16.mxu0 0
  %373 = vmatpush1.bf16.msra.mxu0 %v274
  %374 = vmatprep.subr.bf16.mxu0 0
  %375 = vmatpush1.bf16.msra.mxu0 %v273
  %376 = vmatprep.subr.bf16.mxu0 0
  %377 = vmatpush1.bf16.msra.mxu0 %v272
  %378 = vmatprep.subr.bf16.mxu0 0
  %379 = vmatpush1.bf16.msra.mxu0 %v271
  %380 = vmatprep.subr.bf16.mxu0 0
  %381 = vmatpush1.bf16.msra.mxu0 %v270
  %382 = vmatprep.subr.bf16.mxu0 0
  %383 = vmatpush2.bf16.msra.mxu0 %v285
  %384 = vmatprep.subr.bf16.mxu0 0
  %385 = vmatpush2.bf16.msra.mxu0 %v284
  %386 = vmatprep.subr.bf16.mxu0 0
  %387 = vmatpush2.bf16.msra.mxu0 %v283
  %388 = vmatprep.subr.bf16.mxu0 0
  %389 = vmatpush2.bf16.msra.mxu0 %v282
  %390 = vmatprep.subr.bf16.mxu0 0
  %391 = vmatpush2.bf16.msra.mxu0 %v281
  %392 = vmatprep.subr.bf16.mxu0 0
  %393 = vmatpush2.bf16.msra.mxu0 %v280
  %394 = vmatprep.subr.bf16.mxu0 0
  %395 = vmatpush2.bf16.msra.mxu0 %v279
  %396 = vmatprep.subr.bf16.mxu0 0
  %397 = vmatpush2.bf16.msra.mxu0 %v278
  %398 = vmatprep.mubr.bf16.mxu0 %v113
  %399 = vmatmul.mubr.bf16.gmra.mxu0 %v112
  %v400 = vpop.f32.mrf.mxu0
  %v401 = vadd.f32 %v353, %v400
  %v402 = vpop.f32.mrf.mxu0
  %v403 = vpop.f32.mrf.mxu0
  %v404 = vadd.f32 %v356, %v403
  %v405 = vpop.f32.mrf.mxu0
  %406 = vmatprep.mubr.bf16.mxu0 %v117
  %407 = vmatmul.mubr.bf16.gmra.mxu0 %v116
  %v408 = vpop.f32.mrf.mxu0
  %v409 = vadd.f32 %v361, %v408
  %v410 = vpop.f32.mrf.mxu0
  %v411 = vpop.f32.mrf.mxu0
  %v412 = vpop.f32.mrf.mxu0
  %413 = vdwg.mxu0
  %v414 = vmax.f32 %v401, 0.0
  %v415 = vmax.f32 %v404, 0.0
  %v416 = vmax.f32 %v409, 0.0
  %v417 = vpack.c.bf16 %v415, %v414
  %v418 = vpack.c.bf16 %v416, %v416
  %v421 = vunpack.c.l.b16 %v417
  %v422 = vunpack.c.h.b16 %v417
  %v423 = vunpack.c.l.b16 %v418
  %v424 = vpack.c.b16 %v421, %v421
  %v425 = vpack.c.b16 %v422, %v422
  %v426 = vpack.c.b16 %v423, %v423
  %430 = vst [vmem:[%s3] sm:$0xf] %v424
  %431 = vst [vmem:[%s3 + $0x4] sm:$0xf] %v425
  %432 = vst [vmem:[%s3 + $0x8] sm:$0x1] %v426
  // Predicated region
  $region14: #{actor_critic_forward.5} parent=0 // pred_check
    _
  $region15: #{actor_critic_forward.5} parent=0 // pred_check_branch
    %434 = sbr.rel (0) target = $region17
  $region16: #{actor_critic_forward.5} parent=0 // pred_region
    _
  $region17: #{actor_critic_forward.5} parent=0 // pred_fallthru
    _
  // Predicated region
  $region18: #{actor_critic_forward.5} parent=0 // pred_check
    _
  $region19: #{actor_critic_forward.5} parent=0 // pred_check_branch
    %436 = sbr.rel (0) target = $region21
  $region20: #{actor_critic_forward.5} parent=0 // pred_region
    _
  $region21: #{actor_critic_forward.5} parent=0 // pred_fallthru
    _

// kernel: actor_critic_forward.6
$region0: #{actor_critic_forward.6}
  #allocation0 [shape = 'u32[]', space=smem, size = 0x4, offset = 0x4, fixed_abs, tag = 'smem constant byte address 0x4 - core index']
  #allocation1 [shape = 'u32[144,128]{1,0:T(1,128)}', space=vmem, size = 0x12000, scoped, tag = 'internal scratch']
  %s0 = inlined_call_operand.vmem [shape: bf16[2,640], index: 0, kind: input, shape index: {}]
  %s1 = inlined_call_operand.vmem [shape: bf16[640,128], index: 1, kind: input, shape index: {}]
  %s2 = inlined_call_operand.vmem [shape: f32[1,128], index: 2, kind: input, shape index: {}]
  %s3 = inlined_call_operand.vmem [shape: bf16[2,128], index: 3, kind: output, shape index: {}]
  %s4 = sld [smem:[#allocation0]]
  $region22: #{actor_critic_forward.6} parent=0
    _
  %s6 = ssub.s32 1, %s4
  %s7 = scalar_select 0, %s6, %s4
  // Predicated region
  $region2: #{actor_critic_forward.6} parent=0 // pred_check
    _
  $region3: #{actor_critic_forward.6} parent=0 // pred_check_branch
    %9 = sbr.rel (0) target = $region5
  $region4: #{actor_critic_forward.6} parent=0 // pred_region
    _
  $region5: #{actor_critic_forward.6} parent=0 // pred_fallthru
    _
  // Predicated region
  $region6: #{actor_critic_forward.6} parent=0 // pred_check
    _
  $region7: #{actor_critic_forward.6} parent=0 // pred_check_branch
    %11 = sbr.rel (0) target = $region9
  $region8: #{actor_critic_forward.6} parent=0 // pred_region
    _
  $region9: #{actor_critic_forward.6} parent=0 // pred_fallthru
    _
  // Predicated region
  $region10: #{actor_critic_forward.6} parent=0 // pred_check
    _
  $region11: #{actor_critic_forward.6} parent=0 // pred_check_branch
    %13 = sbr.rel (0) target = $region13
  $region12: #{actor_critic_forward.6} parent=0 // pred_region
    _
  $region13: #{actor_critic_forward.6} parent=0 // pred_fallthru
    _
  %v15 = vld [vmem:[%s0] sm:$0x1f]
  %v16 = vld [vmem:[%s1] sm:$0xf]
  %v17 = vld [vmem:[%s1 + $0x4] sm:$0xf]
  %v18 = vld [vmem:[%s1 + $0x8] sm:$0xf]
  %v19 = vld [vmem:[%s1 + $0xc] sm:$0xf]
  %v20 = vld [vmem:[%s1 + $0x10] sm:$0xf]
  %v21 = vld [vmem:[%s1 + $0x14] sm:$0xf]
  %v22 = vld [vmem:[%s1 + $0x18] sm:$0xf]
  %v23 = vld [vmem:[%s1 + $0x1c] sm:$0xf]
  %v24 = vld [vmem:[%s1 + $0x20] sm:$0xf]
  %v25 = vld [vmem:[%s1 + $0x24] sm:$0xf]
  %v26 = vld [vmem:[%s1 + $0x28] sm:$0xf]
  %v27 = vld [vmem:[%s1 + $0x2c] sm:$0xf]
  %v28 = vld [vmem:[%s1 + $0x30] sm:$0xf]
  %v29 = vld [vmem:[%s1 + $0x34] sm:$0xf]
  %v30 = vld [vmem:[%s1 + $0x38] sm:$0xf]
  %v31 = vld [vmem:[%s1 + $0x3c] sm:$0xf]
  %v32 = vld [vmem:[%s1 + $0x40] sm:$0xf]
  %v33 = vld [vmem:[%s1 + $0x44] sm:$0xf]
  %v34 = vld [vmem:[%s1 + $0x48] sm:$0xf]
  %v35 = vld [vmem:[%s1 + $0x4c] sm:$0xf]
  %v36 = vld [vmem:[%s1 + $0x50] sm:$0xf]
  %v37 = vld [vmem:[%s1 + $0x54] sm:$0xf]
  %v38 = vld [vmem:[%s1 + $0x58] sm:$0xf]
  %v39 = vld [vmem:[%s1 + $0x5c] sm:$0xf]
  %v40 = vld [vmem:[%s1 + $0x60] sm:$0xf]
  %v41 = vld [vmem:[%s1 + $0x64] sm:$0xf]
  %v42 = vld [vmem:[%s1 + $0x68] sm:$0xf]
  %v43 = vld [vmem:[%s1 + $0x6c] sm:$0xf]
  %v44 = vld [vmem:[%s1 + $0x70] sm:$0xf]
  %v45 = vld [vmem:[%s1 + $0x74] sm:$0xf]
  %v46 = vld [vmem:[%s1 + $0x78] sm:$0xf]
  %v47 = vld [vmem:[%s1 + $0x7c] sm:$0xf]
  %v48 = vld [vmem:[%s1 + $0x80] sm:$0xf]
  %v49 = vld [vmem:[%s1 + $0x84] sm:$0xf]
  %v50 = vld [vmem:[%s1 + $0x88] sm:$0xf]
  %v51 = vld [vmem:[%s1 + $0x8c] sm:$0xf]
  %v52 = vld [vmem:[%s1 + $0x90] sm:$0xf]
  %v53 = vld [vmem:[%s1 + $0x94] sm:$0xf]
  %v54 = vld [vmem:[%s1 + $0x98] sm:$0xf]
  %v55 = vld [vmem:[%s1 + $0x9c] sm:$0xf]
  %v56 = vld [vmem:[%s1 + $0xa0] sm:$0xf]
  %v57 = vld [vmem:[%s1 + $0xa4] sm:$0xf]
  %v58 = vld [vmem:[%s1 + $0xa8] sm:$0xf]
  %v59 = vld [vmem:[%s1 + $0xac] sm:$0xf]
  %v60 = vld [vmem:[%s1 + $0xb0] sm:$0xf]
  %v61 = vld [vmem:[%s1 + $0xb4] sm:$0xf]
  %v62 = vld [vmem:[%s1 + $0xb8] sm:$0xf]
  %v63 = vld [vmem:[%s1 + $0xbc] sm:$0xf]
  %v64 = vld [vmem:[%s1 + $0xc0] sm:$0xf]
  %v65 = vld [vmem:[%s1 + $0xc4] sm:$0xf]
  %v66 = vld [vmem:[%s1 + $0xc8] sm:$0xf]
  %v67 = vld [vmem:[%s1 + $0xcc] sm:$0xf]
  %v68 = vld [vmem:[%s1 + $0xd0] sm:$0xf]
  %v69 = vld [vmem:[%s1 + $0xd4] sm:$0xf]
  %v70 = vld [vmem:[%s1 + $0xd8] sm:$0xf]
  %v71 = vld [vmem:[%s1 + $0xdc] sm:$0xf]
  %v72 = vld [vmem:[%s1 + $0xe0] sm:$0xf]
  %v73 = vld [vmem:[%s1 + $0xe4] sm:$0xf]
  %v74 = vld [vmem:[%s1 + $0xe8] sm:$0xf]
  %v75 = vld [vmem:[%s1 + $0xec] sm:$0xf]
  %v76 = vld [vmem:[%s1 + $0xf0] sm:$0xf]
  %v77 = vld [vmem:[%s1 + $0xf4] sm:$0xf]
  %v78 = vld [vmem:[%s1 + $0xf8] sm:$0xf]
  %v79 = vld [vmem:[%s1 + $0xfc] sm:$0xf]
  %v80 = vld [vmem:[%s1 + $0x100] sm:$0xf]
  %v81 = vld [vmem:[%s1 + $0x104] sm:$0xf]
  %v82 = vld [vmem:[%s1 + $0x108] sm:$0xf]
  %v83 = vld [vmem:[%s1 + $0x10c] sm:$0xf]
  %v84 = vld [vmem:[%s1 + $0x110] sm:$0xf]
  %v85 = vld [vmem:[%s1 + $0x114] sm:$0xf]
  %v86 = vld [vmem:[%s1 + $0x118] sm:$0xf]
  %v87 = vld [vmem:[%s1 + $0x11c] sm:$0xf]
  %v88 = vld [vmem:[%s1 + $0x120] sm:$0xf]
  %v89 = vld [vmem:[%s1 + $0x124] sm:$0xf]
  %v90 = vld [vmem:[%s1 + $0x128] sm:$0xf]
  %v91 = vld [vmem:[%s1 + $0x12c] sm:$0xf]
  %v92 = vld [vmem:[%s1 + $0x130] sm:$0xf]
  %v93 = vld [vmem:[%s1 + $0x134] sm:$0xf]
  %v94 = vld [vmem:[%s1 + $0x138] sm:$0xf]
  %v95 = vld [vmem:[%s1 + $0x13c] sm:$0xf]
  %v96 = vld [vmem:[%s2] sm:$0x1]
  %v98 = vlaneseq
  %v99 = vshrl.u32 %v98, 7
  %v100 = vsub.s32 0, %v99
  %v101 = vrot.slane %v96, %v100
  %v104 = vcombine.high %v15, %v15
  %v106 = vunpack.c.l.s4 1966171168
  %v107 = vunpack.c.0.s8 %v106
  %v108 = vlaneseq
  %v109 = vshrl.u32 %v108, 7
  %v110 = vsub.s32 %v107, %v109
  %v111 = vrot.slane %v15, %v110
  %v113 = vunpack.c.l.s4 1966171168
  %v114 = vunpack.c.0.s8 %v113
  %v115 = vlaneseq
  %v116 = vshrl.u32 %v115, 7
  %v117 = vsub.s32 %v114, %v116
  %v118 = vrot.slane %v104, %v117
  %v119 = vcombine.high %v111, %v111
  %v121 = vunpack.c.l.s4 1966171168
  %v122 = vunpack.c.0.s8 %v121
  %v123 = vlaneseq
  %v124 = vshrl.u32 %v123, 7
  %v125 = vsub.s32 %v122, %v124
  %v126 = vrot.slane %v111, %v125
  %v128 = vunpack.c.l.s4 1966171168
  %v129 = vunpack.c.0.s8 %v128
  %v130 = vlaneseq
  %v131 = vshrl.u32 %v130, 7
  %v132 = vsub.s32 %v129, %v131
  %v133 = vrot.slane %v118, %v132
  %v135 = vunpack.c.l.s4 1966171168
  %v136 = vunpack.c.0.s8 %v135
  %v137 = vlaneseq
  %v138 = vshrl.u32 %v137, 7
  %v139 = vsub.s32 %v136, %v138
  %v140 = vrot.slane %v119, %v139
  %v141 = vcombine.high %v126, %v126
  %v142 = vcombine.high %v140, %v140
  %v228 = vunpack.c.l.b16 %v16
  %v229 = vunpack.c.l.b16 %v17
  %v230 = vunpack.c.l.b16 %v18
  %v231 = vunpack.c.l.b16 %v19
  %v232 = vunpack.c.l.b16 %v20
  %v233 = vunpack.c.l.b16 %v21
  %v234 = vunpack.c.l.b16 %v22
  %v235 = vunpack.c.l.b16 %v23
  %v236 = vunpack.c.l.b16 %v24
  %v237 = vunpack.c.l.b16 %v25
  %v238 = vunpack.c.l.b16 %v26
  %v239 = vunpack.c.l.b16 %v27
  %v240 = vunpack.c.l.b16 %v28
  %v241 = vunpack.c.l.b16 %v29
  %v242 = vunpack.c.l.b16 %v30
  %v243 = vunpack.c.l.b16 %v31
  %v244 = vunpack.c.l.b16 %v32
  %v245 = vunpack.c.l.b16 %v33
  %v246 = vunpack.c.l.b16 %v34
  %v247 = vunpack.c.l.b16 %v35
  %v248 = vunpack.c.l.b16 %v36
  %v249 = vunpack.c.l.b16 %v37
  %v250 = vunpack.c.l.b16 %v38
  %v251 = vunpack.c.l.b16 %v39
  %v252 = vunpack.c.l.b16 %v40
  %v253 = vunpack.c.l.b16 %v41
  %v254 = vunpack.c.l.b16 %v42
  %v255 = vunpack.c.l.b16 %v43
  %v256 = vunpack.c.l.b16 %v44
  %v257 = vunpack.c.l.b16 %v45
  %v258 = vunpack.c.l.b16 %v46
  %v259 = vunpack.c.l.b16 %v47
  %v260 = vunpack.c.l.b16 %v48
  %v261 = vunpack.c.l.b16 %v49
  %v262 = vunpack.c.l.b16 %v50
  %v263 = vunpack.c.l.b16 %v51
  %v264 = vunpack.c.l.b16 %v52
  %v265 = vunpack.c.l.b16 %v53
  %v266 = vunpack.c.l.b16 %v54
  %v267 = vunpack.c.l.b16 %v55
  %v268 = vunpack.c.l.b16 %v56
  %v269 = vunpack.c.l.b16 %v57
  %v270 = vunpack.c.l.b16 %v58
  %v271 = vunpack.c.l.b16 %v59
  %v272 = vunpack.c.l.b16 %v60
  %v273 = vunpack.c.l.b16 %v61
  %v274 = vunpack.c.l.b16 %v62
  %v275 = vunpack.c.l.b16 %v63
  %v276 = vunpack.c.l.b16 %v64
  %v277 = vunpack.c.l.b16 %v65
  %v278 = vunpack.c.l.b16 %v66
  %v279 = vunpack.c.l.b16 %v67
  %v280 = vunpack.c.l.b16 %v68
  %v281 = vunpack.c.l.b16 %v69
  %v282 = vunpack.c.l.b16 %v70
  %v283 = vunpack.c.l.b16 %v71
  %v284 = vunpack.c.l.b16 %v72
  %v285 = vunpack.c.l.b16 %v73
  %v286 = vunpack.c.l.b16 %v74
  %v287 = vunpack.c.l.b16 %v75
  %v288 = vunpack.c.l.b16 %v76
  %v289 = vunpack.c.l.b16 %v77
  %v290 = vunpack.c.l.b16 %v78
  %v291 = vunpack.c.l.b16 %v79
  %v292 = vunpack.c.l.b16 %v80
  %v293 = vunpack.c.l.b16 %v81
  %v294 = vunpack.c.l.b16 %v82
  %v295 = vunpack.c.l.b16 %v83
  %v296 = vunpack.c.l.b16 %v84
  %v297 = vunpack.c.l.b16 %v85
  %v298 = vunpack.c.l.b16 %v86
  %v299 = vunpack.c.l.b16 %v87
  %v300 = vunpack.c.l.b16 %v88
  %v301 = vunpack.c.l.b16 %v89
  %v302 = vunpack.c.l.b16 %v90
  %v303 = vunpack.c.l.b16 %v91
  %v304 = vunpack.c.l.b16 %v92
  %v305 = vunpack.c.l.b16 %v93
  %v306 = vunpack.c.l.b16 %v94
  %v307 = vunpack.c.l.b16 %v95
  %v308 = vpack.c.b16 %v229, %v228
  %v309 = vpack.c.b16 %v231, %v230
  %v310 = vpack.c.b16 %v233, %v232
  %v311 = vpack.c.b16 %v235, %v234
  %v312 = vpack.c.b16 %v237, %v236
  %v313 = vpack.c.b16 %v239, %v238
  %v314 = vpack.c.b16 %v241, %v240
  %v315 = vpack.c.b16 %v243, %v242
  %v316 = vpack.c.b16 %v245, %v244
  %v317 = vpack.c.b16 %v247, %v246
  %v318 = vpack.c.b16 %v249, %v248
  %v319 = vpack.c.b16 %v251, %v250
  %v320 = vpack.c.b16 %v253, %v252
  %v321 = vpack.c.b16 %v255, %v254
  %v322 = vpack.c.b16 %v257, %v256
  %v323 = vpack.c.b16 %v259, %v258
  %v324 = vpack.c.b16 %v261, %v260
  %v325 = vpack.c.b16 %v263, %v262
  %v326 = vpack.c.b16 %v265, %v264
  %v327 = vpack.c.b16 %v267, %v266
  %v328 = vpack.c.b16 %v269, %v268
  %v329 = vpack.c.b16 %v271, %v270
  %v330 = vpack.c.b16 %v273, %v272
  %v331 = vpack.c.b16 %v275, %v274
  %v332 = vpack.c.b16 %v277, %v276
  %v333 = vpack.c.b16 %v279, %v278
  %v334 = vpack.c.b16 %v281, %v280
  %v335 = vpack.c.b16 %v283, %v282
  %v336 = vpack.c.b16 %v285, %v284
  %v337 = vpack.c.b16 %v287, %v286
  %v338 = vpack.c.b16 %v289, %v288
  %v339 = vpack.c.b16 %v291, %v290
  %v340 = vpack.c.b16 %v293, %v292
  %v341 = vpack.c.b16 %v295, %v294
  %v342 = vpack.c.b16 %v297, %v296
  %v343 = vpack.c.b16 %v299, %v298
  %v344 = vpack.c.b16 %v301, %v300
  %v345 = vpack.c.b16 %v303, %v302
  %v346 = vpack.c.b16 %v305, %v304
  %v347 = vpack.c.b16 %v307, %v306
  %388 = vmatprep.subr.bf16.mxu0 0
  %389 = vmatpush1.bf16.msra.mxu0 %v315
  %390 = vmatprep.subr.bf16.mxu0 0
  %391 = vmatpush1.bf16.msra.mxu0 %v314
  %392 = vmatprep.subr.bf16.mxu0 0
  %393 = vmatpush1.bf16.msra.mxu0 %v313
  %394 = vmatprep.subr.bf16.mxu0 0
  %395 = vmatpush1.bf16.msra.mxu0 %v312
  %396 = vmatprep.subr.bf16.mxu0 0
  %397 = vmatpush1.bf16.msra.mxu0 %v311
  %398 = vmatprep.subr.bf16.mxu0 0
  %399 = vmatpush1.bf16.msra.mxu0 %v310
  %400 = vmatprep.subr.bf16.mxu0 0
  %401 = vmatpush1.bf16.msra.mxu0 %v309
  %402 = vmatprep.subr.bf16.mxu0 0
  %403 = vmatpush1.bf16.msra.mxu0 %v308
  %404 = vmatprep.subr.bf16.mxu0 0
  %405 = vmatpush2.bf16.msra.mxu0 %v323
  %406 = vmatprep.subr.bf16.mxu0 0
  %407 = vmatpush2.bf16.msra.mxu0 %v322
  %408 = vmatprep.subr.bf16.mxu0 0
  %409 = vmatpush2.bf16.msra.mxu0 %v321
  %410 = vmatprep.subr.bf16.mxu0 0
  %411 = vmatpush2.bf16.msra.mxu0 %v320
  %412 = vmatprep.subr.bf16.mxu0 0
  %413 = vmatpush2.bf16.msra.mxu0 %v319
  %414 = vmatprep.subr.bf16.mxu0 0
  %415 = vmatpush2.bf16.msra.mxu0 %v318
  %416 = vmatprep.subr.bf16.mxu0 0
  %417 = vmatpush2.bf16.msra.mxu0 %v317
  %418 = vmatprep.subr.bf16.mxu0 0
  %419 = vmatpush2.bf16.msra.mxu0 %v316
  %420 = vmatprep.mubr.bf16.mxu0 %v140
  %421 = vmatmul.mubr.bf16.gmra.mxu0 %v126
  %v422 = vpop.f32.mrf.mxu0
  %v423 = vadd.f32 %v101, %v422
  %v424 = vpop.f32.mrf.mxu0
  %v425 = vpop.f32.mrf.mxu0
  %v426 = vpop.f32.mrf.mxu0
  %427 = vdwg.mxu0
  %428 = vmatprep.subr.bf16.mxu0 0
  %429 = vmatpush1.bf16.msra.mxu0 %v331
  %430 = vmatprep.subr.bf16.mxu0 0
  %431 = vmatpush1.bf16.msra.mxu0 %v330
  %432 = vmatprep.subr.bf16.mxu0 0
  %433 = vmatpush1.bf16.msra.mxu0 %v329
  %434 = vmatprep.subr.bf16.mxu0 0
  %435 = vmatpush1.bf16.msra.mxu0 %v328
  %436 = vmatprep.subr.bf16.mxu0 0
  %437 = vmatpush1.bf16.msra.mxu0 %v327
  %438 = vmatprep.subr.bf16.mxu0 0
  %439 = vmatpush1.bf16.msra.mxu0 %v326
  %440 = vmatprep.subr.bf16.mxu0 0
  %441 = vmatpush1.bf16.msra.mxu0 %v325
  %442 = vmatprep.subr.bf16.mxu0 0
  %443 = vmatpush1.bf16.msra.mxu0 %v324
  %444 = vmatprep.subr.bf16.mxu0 0
  %445 = vmatpush2.bf16.msra.mxu0 %v339
  %446 = vmatprep.subr.bf16.mxu0 0
  %447 = vmatpush2.bf16.msra.mxu0 %v338
  %448 = vmatprep.subr.bf16.mxu0 0
  %449 = vmatpush2.bf16.msra.mxu0 %v337
  %450 = vmatprep.subr.bf16.mxu0 0
  %451 = vmatpush2.bf16.msra.mxu0 %v336
  %452 = vmatprep.subr.bf16.mxu0 0
  %453 = vmatpush2.bf16.msra.mxu0 %v335
  %454 = vmatprep.subr.bf16.mxu0 0
  %455 = vmatpush2.bf16.msra.mxu0 %v334
  %456 = vmatprep.subr.bf16.mxu0 0
  %457 = vmatpush2.bf16.msra.mxu0 %v333
  %458 = vmatprep.subr.bf16.mxu0 0
  %459 = vmatpush2.bf16.msra.mxu0 %v332
  %460 = vmatprep.mubr.bf16.mxu0 %v142
  %461 = vmatmul.mubr.bf16.gmra.mxu0 %v141
  %v462 = vpop.f32.mrf.mxu0
  %v463 = vadd.f32 %v423, %v462
  %v464 = vpop.f32.mrf.mxu0
  %v465 = vpop.f32.mrf.mxu0
  %v466 = vpop.f32.mrf.mxu0
  %467 = vdwg.mxu0
  %468 = vmatprep.subr.bf16.mxu0 0
  %469 = vmatpush1.bf16.msra.mxu0 %v347
  %470 = vmatprep.subr.bf16.mxu0 0
  %471 = vmatpush1.bf16.msra.mxu0 %v346
  %472 = vmatprep.subr.bf16.mxu0 0
  %473 = vmatpush1.bf16.msra.mxu0 %v345
  %474 = vmatprep.subr.bf16.mxu0 0
  %475 = vmatpush1.bf16.msra.mxu0 %v344
  %476 = vmatprep.subr.bf16.mxu0 0
  %477 = vmatpush1.bf16.msra.mxu0 %v343
  %478 = vmatprep.subr.bf16.mxu0 0
  %479 = vmatpush1.bf16.msra.mxu0 %v342
  %480 = vmatprep.subr.bf16.mxu0 0
  %481 = vmatpush1.bf16.msra.mxu0 %v341
  %482 = vmatprep.subr.bf16.mxu0 0
  %483 = vmatpush1.bf16.msra.mxu0 %v340
  %484 = vmatprep.subr.bf16.mxu0 0
  %485 = vmatpush2.bf16.msra.mxu0 0
  %486 = vmatprep.subr.bf16.mxu0 0
  %487 = vmatpush2.bf16.msra.mxu0 0
  %488 = vmatprep.subr.bf16.mxu0 0
  %489 = vmatpush2.bf16.msra.mxu0 0
  %490 = vmatprep.subr.bf16.mxu0 0
  %491 = vmatpush2.bf16.msra.mxu0 0
  %492 = vmatprep.subr.bf16.mxu0 0
  %493 = vmatpush2.bf16.msra.mxu0 0
  %494 = vmatprep.subr.bf16.mxu0 0
  %495 = vmatpush2.bf16.msra.mxu0 0
  %496 = vmatprep.subr.bf16.mxu0 0
  %497 = vmatpush2.bf16.msra.mxu0 0
  %498 = vmatprep.subr.bf16.mxu0 0
  %499 = vmatpush2.bf16.msra.mxu0 0
  %500 = vmatprep.mubr.bf16.mxu0 0
  %501 = vmatmul.mubr.bf16.gmra.mxu0 %v133
  %v502 = vpop.f32.mrf.mxu0
  %v503 = vadd.f32 %v463, %v502
  %v504 = vpop.f32.mrf.mxu0
  %v505 = vpop.f32.mrf.mxu0
  %v506 = vpop.f32.mrf.mxu0
  %507 = vdwg.mxu0
  %v508 = vmax.f32 %v503, 0.0
  %v509 = vpack.c.bf16 %v508, %v508
  %510 = vst [vmem:[%s3] sm:$0x1] %v509
  // Predicated region
  $region14: #{actor_critic_forward.6} parent=0 // pred_check
    _
  $region15: #{actor_critic_forward.6} parent=0 // pred_check_branch
    %512 = sbr.rel (0) target = $region17
  $region16: #{actor_critic_forward.6} parent=0 // pred_region
    _
  $region17: #{actor_critic_forward.6} parent=0 // pred_fallthru
    _
  // Predicated region
  $region18: #{actor_critic_forward.6} parent=0 // pred_check
    _
  $region19: #{actor_critic_forward.6} parent=0 // pred_check_branch
    %514 = sbr.rel (0) target = $region21
  $region20: #{actor_critic_forward.6} parent=0 // pred_region
    _
  $region21: #{actor_critic_forward.6} parent=0 // pred_fallthru
    _

// kernel: actor_critic_forward.7
$region0: #{actor_critic_forward.7}
  #allocation0 [shape = 'u32[]', space=smem, size = 0x4, offset = 0x4, fixed_abs, tag = 'smem constant byte address 0x4 - core index']
  #allocation1 [shape = 'u32[144,128]{1,0:T(1,128)}', space=vmem, size = 0x12000, scoped, tag = 'internal scratch']
  %s0 = inlined_call_operand.vmem [shape: bf16[2,128], index: 0, kind: input, shape index: {}]
  %s1 = inlined_call_operand.vmem [shape: bf16[128,512], index: 1, kind: input, shape index: {}]
  %s2 = inlined_call_operand.vmem [shape: f32[1,512], index: 2, kind: input, shape index: {}]
  %s3 = inlined_call_operand.vmem [shape: bf16[512,128], index: 3, kind: input, shape index: {}]
  %s4 = inlined_call_operand.vmem [shape: f32[1,128], index: 4, kind: input, shape index: {}]
  %s5 = inlined_call_operand.vmem [shape: f32[2,128], index: 5, kind: output, shape index: {}]
  %s6 = sld [smem:[#allocation0]]
  $region30: #{actor_critic_forward.7} parent=0
    _
  %s8 = ssub.s32 1, %s6
  %s9 = scalar_select 0, %s8, %s6
  // Predicated region
  $region2: #{actor_critic_forward.7} parent=0 // pred_check
    _
  $region3: #{actor_critic_forward.7} parent=0 // pred_check_branch
    %11 = sbr.rel (0) target = $region5
  $region4: #{actor_critic_forward.7} parent=0 // pred_region
    _
  $region5: #{actor_critic_forward.7} parent=0 // pred_fallthru
    _
  // Predicated region
  $region6: #{actor_critic_forward.7} parent=0 // pred_check
    _
  $region7: #{actor_critic_forward.7} parent=0 // pred_check_branch
    %13 = sbr.rel (0) target = $region9
  $region8: #{actor_critic_forward.7} parent=0 // pred_region
    _
  $region9: #{actor_critic_forward.7} parent=0 // pred_fallthru
    _
  // Predicated region
  $region10: #{actor_critic_forward.7} parent=0 // pred_check
    _
  $region11: #{actor_critic_forward.7} parent=0 // pred_check_branch
    %15 = sbr.rel (0) target = $region13
  $region12: #{actor_critic_forward.7} parent=0 // pred_region
    _
  $region13: #{actor_critic_forward.7} parent=0 // pred_fallthru
    _
  // Predicated region
  $region14: #{actor_critic_forward.7} parent=0 // pred_check
    _
  $region15: #{actor_critic_forward.7} parent=0 // pred_check_branch
    %17 = sbr.rel (0) target = $region17
  $region16: #{actor_critic_forward.7} parent=0 // pred_region
    _
  $region17: #{actor_critic_forward.7} parent=0 // pred_fallthru
    _
  // Predicated region
  $region18: #{actor_critic_forward.7} parent=0 // pred_check
    _
  $region19: #{actor_critic_forward.7} parent=0 // pred_check_branch
    %19 = sbr.rel (0) target = $region21
  $region20: #{actor_critic_forward.7} parent=0 // pred_region
    _
  $region21: #{actor_critic_forward.7} parent=0 // pred_fallthru
    _
  %v21 = vld [vmem:[%s0] sm:$0x1]
  %v22 = vld [vmem:[%s1] sm:$0xff]
  %v23 = vld [vmem:[%s1 + $0x8] sm:$0xff]
  %v24 = vld [vmem:[%s1 + $0x10] sm:$0xff]
  %v25 = vld [vmem:[%s1 + $0x18] sm:$0xff]
  %v26 = vld [vmem:[%s1 + $0x20] sm:$0xff]
  %v27 = vld [vmem:[%s1 + $0x28] sm:$0xff]
  %v28 = vld [vmem:[%s1 + $0x30] sm:$0xff]
  %v29 = vld [vmem:[%s1 + $0x38] sm:$0xff]
  %v30 = vld [vmem:[%s1 + $0x40] sm:$0xff]
  %v31 = vld [vmem:[%s1 + $0x48] sm:$0xff]
  %v32 = vld [vmem:[%s1 + $0x50] sm:$0xff]
  %v33 = vld [vmem:[%s1 + $0x58] sm:$0xff]
  %v34 = vld [vmem:[%s1 + $0x60] sm:$0xff]
  %v35 = vld [vmem:[%s1 + $0x68] sm:$0xff]
  %v36 = vld [vmem:[%s1 + $0x70] sm:$0xff]
  %v37 = vld [vmem:[%s1 + $0x78] sm:$0xff]
  %v38 = vld [vmem:[%s1 + $0x80] sm:$0xff]
  %v39 = vld [vmem:[%s1 + $0x88] sm:$0xff]
  %v40 = vld [vmem:[%s1 + $0x90] sm:$0xff]
  %v41 = vld [vmem:[%s1 + $0x98] sm:$0xff]
  %v42 = vld [vmem:[%s1 + $0xa0] sm:$0xff]
  %v43 = vld [vmem:[%s1 + $0xa8] sm:$0xff]
  %v44 = vld [vmem:[%s1 + $0xb0] sm:$0xff]
  %v45 = vld [vmem:[%s1 + $0xb8] sm:$0xff]
  %v46 = vld [vmem:[%s1 + $0xc0] sm:$0xff]
  %v47 = vld [vmem:[%s1 + $0xc8] sm:$0xff]
  %v48 = vld [vmem:[%s1 + $0xd0] sm:$0xff]
  %v49 = vld [vmem:[%s1 + $0xd8] sm:$0xff]
  %v50 = vld [vmem:[%s1 + $0xe0] sm:$0xff]
  %v51 = vld [vmem:[%s1 + $0xe8] sm:$0xff]
  %v52 = vld [vmem:[%s1 + $0xf0] sm:$0xff]
  %v53 = vld [vmem:[%s1 + $0xf8] sm:$0xff]
  %v54 = vld [vmem:[%s2] sm:$0xf]
  %v56 = vlaneseq
  %v57 = vshrl.u32 %v56, 7
  %v58 = vsub.s32 0, %v57
  %v59 = vrot.slane %v54, %v58
  %v60 = vlaneseq
  %v61 = vshrl.u32 %v60, 7
  %v62 = vsub.s32 1, %v61
  %v63 = vrot.slane %v54, %v62
  %v64 = vlaneseq
  %v65 = vshrl.u32 %v64, 7
  %v66 = vsub.s32 2, %v65
  %v67 = vrot.slane %v54, %v66
  %v68 = vlaneseq
  %v69 = vshrl.u32 %v68, 7
  %v70 = vsub.s32 3, %v69
  %v71 = vrot.slane %v54, %v70
  %v108 = vunpack.c.l.b16 %v22
  %v109 = vunpack.c.h.b16 %v22
  %v110 = vunpack.c.l.b16 %v23
  %v111 = vunpack.c.h.b16 %v23
  %v112 = vunpack.c.l.b16 %v24
  %v113 = vunpack.c.h.b16 %v24
  %v114 = vunpack.c.l.b16 %v25
  %v115 = vunpack.c.h.b16 %v25
  %v116 = vunpack.c.l.b16 %v26
  %v117 = vunpack.c.h.b16 %v26
  %v118 = vunpack.c.l.b16 %v27
  %v119 = vunpack.c.h.b16 %v27
  %v120 = vunpack.c.l.b16 %v28
  %v121 = vunpack.c.h.b16 %v28
  %v122 = vunpack.c.l.b16 %v29
  %v123 = vunpack.c.h.b16 %v29
  %v124 = vunpack.c.l.b16 %v30
  %v125 = vunpack.c.h.b16 %v30
  %v126 = vunpack.c.l.b16 %v31
  %v127 = vunpack.c.h.b16 %v31
  %v128 = vunpack.c.l.b16 %v32
  %v129 = vunpack.c.h.b16 %v32
  %v130 = vunpack.c.l.b16 %v33
  %v131 = vunpack.c.h.b16 %v33
  %v132 = vunpack.c.l.b16 %v34
  %v133 = vunpack.c.h.b16 %v34
  %v134 = vunpack.c.l.b16 %v35
  %v135 = vunpack.c.h.b16 %v35
  %v136 = vunpack.c.l.b16 %v36
  %v137 = vunpack.c.h.b16 %v36
  %v138 = vunpack.c.l.b16 %v37
  %v139 = vunpack.c.h.b16 %v37
  %v140 = vunpack.c.l.b16 %v38
  %v141 = vunpack.c.h.b16 %v38
  %v142 = vunpack.c.l.b16 %v39
  %v143 = vunpack.c.h.b16 %v39
  %v144 = vunpack.c.l.b16 %v40
  %v145 = vunpack.c.h.b16 %v40
  %v146 = vunpack.c.l.b16 %v41
  %v147 = vunpack.c.h.b16 %v41
  %v148 = vunpack.c.l.b16 %v42
  %v149 = vunpack.c.h.b16 %v42
  %v150 = vunpack.c.l.b16 %v43
  %v151 = vunpack.c.h.b16 %v43
  %v152 = vunpack.c.l.b16 %v44
  %v153 = vunpack.c.h.b16 %v44
  %v154 = vunpack.c.l.b16 %v45
  %v155 = vunpack.c.h.b16 %v45
  %v156 = vunpack.c.l.b16 %v46
  %v157 = vunpack.c.h.b16 %v46
  %v158 = vunpack.c.l.b16 %v47
  %v159 = vunpack.c.h.b16 %v47
  %v160 = vunpack.c.l.b16 %v48
  %v161 = vunpack.c.h.b16 %v48
  %v162 = vunpack.c.l.b16 %v49
  %v163 = vunpack.c.h.b16 %v49
  %v164 = vunpack.c.l.b16 %v50
  %v165 = vunpack.c.h.b16 %v50
  %v166 = vunpack.c.l.b16 %v51
  %v167 = vunpack.c.h.b16 %v51
  %v168 = vunpack.c.l.b16 %v52
  %v169 = vunpack.c.h.b16 %v52
  %v170 = vunpack.c.l.b16 %v53
  %v171 = vunpack.c.h.b16 %v53
  %v172 = vpack.c.b16 %v112, %v108
  %v173 = vpack.c.b16 %v113, %v109
  %v174 = vpack.c.b16 %v114, %v110
  %v175 = vpack.c.b16 %v115, %v111
  %v176 = vpack.c.b16 %v120, %v116
  %v177 = vpack.c.b16 %v121, %v117
  %v178 = vpack.c.b16 %v122, %v118
  %v179 = vpack.c.b16 %v123, %v119
  %v180 = vpack.c.b16 %v128, %v124
  %v181 = vpack.c.b16 %v129, %v125
  %v182 = vpack.c.b16 %v130, %v126
  %v183 = vpack.c.b16 %v131, %v127
  %v184 = vpack.c.b16 %v136, %v132
  %v185 = vpack.c.b16 %v137, %v133
  %v186 = vpack.c.b16 %v138, %v134
  %v187 = vpack.c.b16 %v139, %v135
  %v188 = vpack.c.b16 %v144, %v140
  %v189 = vpack.c.b16 %v145, %v141
  %v190 = vpack.c.b16 %v146, %v142
  %v191 = vpack.c.b16 %v147, %v143
  %v192 = vpack.c.b16 %v152, %v148
  %v193 = vpack.c.b16 %v153, %v149
  %v194 = vpack.c.b16 %v154, %v150
  %v195 = vpack.c.b16 %v155, %v151
  %v196 = vpack.c.b16 %v160, %v156
  %v197 = vpack.c.b16 %v161, %v157
  %v198 = vpack.c.b16 %v162, %v158
  %v199 = vpack.c.b16 %v163, %v159
  %v200 = vpack.c.b16 %v168, %v164
  %v201 = vpack.c.b16 %v169, %v165
  %v202 = vpack.c.b16 %v170, %v166
  %v203 = vpack.c.b16 %v171, %v167
  %236 = vmatprep.subr.bf16.mxu0 %v201
  %237 = vmatpush1.bf16.msra.mxu0 %v200
  %238 = vmatprep.subr.bf16.mxu0 %v197
  %239 = vmatpush1.bf16.msra.mxu0 %v196
  %240 = vmatprep.subr.bf16.mxu0 %v193
  %241 = vmatpush1.bf16.msra.mxu0 %v192
  %242 = vmatprep.subr.bf16.mxu0 %v189
  %243 = vmatpush1.bf16.msra.mxu0 %v188
  %244 = vmatprep.subr.bf16.mxu0 %v185
  %245 = vmatpush1.bf16.msra.mxu0 %v184
  %246 = vmatprep.subr.bf16.mxu0 %v181
  %247 = vmatpush1.bf16.msra.mxu0 %v180
  %248 = vmatprep.subr.bf16.mxu0 %v177
  %249 = vmatpush1.bf16.msra.mxu0 %v176
  %250 = vmatprep.subr.bf16.mxu0 %v173
  %251 = vmatpush1.bf16.msra.mxu0 %v172
  %252 = vmatprep.subr.bf16.mxu0 0
  %253 = vmatpush2.bf16.msra.mxu0 0
  %254 = vmatprep.subr.bf16.mxu0 0
  %255 = vmatpush2.bf16.msra.mxu0 0
  %256 = vmatprep.subr.bf16.mxu0 0
  %257 = vmatpush2.bf16.msra.mxu0 0
  %258 = vmatprep.subr.bf16.mxu0 0
  %259 = vmatpush2.bf16.msra.mxu0 0
  %260 = vmatprep.subr.bf16.mxu0 0
  %261 = vmatpush2.bf16.msra.mxu0 0
  %262 = vmatprep.subr.bf16.mxu0 0
  %263 = vmatpush2.bf16.msra.mxu0 0
  %264 = vmatprep.subr.bf16.mxu0 0
  %265 = vmatpush2.bf16.msra.mxu0 0
  %266 = vmatprep.subr.bf16.mxu0 0
  %267 = vmatpush2.bf16.msra.mxu0 0
  %268 = vmatprep.mubr.bf16.mxu0 0
  %269 = vmatmul.mubr.bf16.gmra.mxu0 %v21
  %v270 = vpop.f32.mrf.mxu0
  %v271 = vadd.f32 %v59, %v270
  %v272 = vpop.f32.mrf.mxu0
  %v273 = vadd.f32 %v63, %v272
  %v274 = vpop.f32.mrf.mxu0
  %v275 = vpop.f32.mrf.mxu0
  %276 = vdwg.mxu0
  %277 = vmatprep.subr.bf16.mxu0 %v203
  %278 = vmatpush1.bf16.msra.mxu0 %v202
  %279 = vmatprep.subr.bf16.mxu0 %v199
  %280 = vmatpush1.bf16.msra.mxu0 %v198
  %281 = vmatprep.subr.bf16.mxu0 %v195
  %282 = vmatpush1.bf16.msra.mxu0 %v194
  %283 = vmatprep.subr.bf16.mxu0 %v191
  %284 = vmatpush1.bf16.msra.mxu0 %v190
  %285 = vmatprep.subr.bf16.mxu0 %v187
  %286 = vmatpush1.bf16.msra.mxu0 %v186
  %287 = vmatprep.subr.bf16.mxu0 %v183
  %288 = vmatpush1.bf16.msra.mxu0 %v182
  %289 = vmatprep.subr.bf16.mxu0 %v179
  %290 = vmatpush1.bf16.msra.mxu0 %v178
  %291 = vmatprep.subr.bf16.mxu0 %v175
  %292 = vmatpush1.bf16.msra.mxu0 %v174
  %293 = vmatprep.subr.bf16.mxu0 0
  %294 = vmatpush2.bf16.msra.mxu0 0
  %295 = vmatprep.subr.bf16.mxu0 0
  %296 = vmatpush2.bf16.msra.mxu0 0
  %297 = vmatprep.subr.bf16.mxu0 0
  %298 = vmatpush2.bf16.msra.mxu0 0
  %299 = vmatprep.subr.bf16.mxu0 0
  %300 = vmatpush2.bf16.msra.mxu0 0
  %301 = vmatprep.subr.bf16.mxu0 0
  %302 = vmatpush2.bf16.msra.mxu0 0
  %303 = vmatprep.subr.bf16.mxu0 0
  %304 = vmatpush2.bf16.msra.mxu0 0
  %305 = vmatprep.subr.bf16.mxu0 0
  %306 = vmatpush2.bf16.msra.mxu0 0
  %307 = vmatprep.subr.bf16.mxu0 0
  %308 = vmatpush2.bf16.msra.mxu0 0
  %309 = vmatprep.mubr.bf16.mxu0 0
  %310 = vmatmul.mubr.bf16.gmra.mxu0 %v21
  %v311 = vpop.f32.mrf.mxu0
  %v312 = vadd.f32 %v67, %v311
  %v313 = vpop.f32.mrf.mxu0
  %v314 = vadd.f32 %v71, %v313
  %v315 = vpop.f32.mrf.mxu0
  %v316 = vpop.f32.mrf.mxu0
  %317 = vdwg.mxu0
  %v318 = vmax.f32 %v271, 0.0
  %v319 = vmax.f32 %v273, 0.0
  %v320 = vmax.f32 %v312, 0.0
  %v321 = vmax.f32 %v314, 0.0
  %v322 = vpack.c.bf16 %v318, %v318
  %v323 = vpack.c.bf16 %v319, %v319
  %v324 = vpack.c.bf16 %v320, %v320
  %v325 = vpack.c.bf16 %v321, %v321
  %v326 = vld [vmem:[%s3] sm:$0xf]
  %v327 = vld [vmem:[%s3 + $0x4] sm:$0xf]
  %v328 = vld [vmem:[%s3 + $0x8] sm:$0xf]
  %v329 = vld [vmem:[%s3 + $0xc] sm:$0xf]
  %v330 = vld [vmem:[%s3 + $0x10] sm:$0xf]
  %v331 = vld [vmem:[%s3 + $0x14] sm:$0xf]
  %v332 = vld [vmem:[%s3 + $0x18] sm:$0xf]
  %v333 = vld [vmem:[%s3 + $0x1c] sm:$0xf]
  %v334 = vld [vmem:[%s3 + $0x20] sm:$0xf]
  %v335 = vld [vmem:[%s3 + $0x24] sm:$0xf]
  %v336 = vld [vmem:[%s3 + $0x28] sm:$0xf]
  %v337 = vld [vmem:[%s3 + $0x2c] sm:$0xf]
  %v338 = vld [vmem:[%s3 + $0x30] sm:$0xf]
  %v339 = vld [vmem:[%s3 + $0x34] sm:$0xf]
  %v340 = vld [vmem:[%s3 + $0x38] sm:$0xf]
  %v341 = vld [vmem:[%s3 + $0x3c] sm:$0xf]
  %v342 = vld [vmem:[%s3 + $0x40] sm:$0xf]
  %v343 = vld [vmem:[%s3 + $0x44] sm:$0xf]
  %v344 = vld [vmem:[%s3 + $0x48] sm:$0xf]
  %v345 = vld [vmem:[%s3 + $0x4c] sm:$0xf]
  %v346 = vld [vmem:[%s3 + $0x50] sm:$0xf]
  %v347 = vld [vmem:[%s3 + $0x54] sm:$0xf]
  %v348 = vld [vmem:[%s3 + $0x58] sm:$0xf]
  %v349 = vld [vmem:[%s3 + $0x5c] sm:$0xf]
  %v350 = vld [vmem:[%s3 + $0x60] sm:$0xf]
  %v351 = vld [vmem:[%s3 + $0x64] sm:$0xf]
  %v352 = vld [vmem:[%s3 + $0x68] sm:$0xf]
  %v353 = vld [vmem:[%s3 + $0x6c] sm:$0xf]
  %v354 = vld [vmem:[%s3 + $0x70] sm:$0xf]
  %v355 = vld [vmem:[%s3 + $0x74] sm:$0xf]
  %v356 = vld [vmem:[%s3 + $0x78] sm:$0xf]
  %v357 = vld [vmem:[%s3 + $0x7c] sm:$0xf]
  %v358 = vld [vmem:[%s3 + $0x80] sm:$0xf]
  %v359 = vld [vmem:[%s3 + $0x84] sm:$0xf]
  %v360 = vld [vmem:[%s3 + $0x88] sm:$0xf]
  %v361 = vld [vmem:[%s3 + $0x8c] sm:$0xf]
  %v362 = vld [vmem:[%s3 + $0x90] sm:$0xf]
  %v363 = vld [vmem:[%s3 + $0x94] sm:$0xf]
  %v364 = vld [vmem:[%s3 + $0x98] sm:$0xf]
  %v365 = vld [vmem:[%s3 + $0x9c] sm:$0xf]
  %v366 = vld [vmem:[%s3 + $0xa0] sm:$0xf]
  %v367 = vld [vmem:[%s3 + $0xa4] sm:$0xf]
  %v368 = vld [vmem:[%s3 + $0xa8] sm:$0xf]
  %v369 = vld [vmem:[%s3 + $0xac] sm:$0xf]
  %v370 = vld [vmem:[%s3 + $0xb0] sm:$0xf]
  %v371 = vld [vmem:[%s3 + $0xb4] sm:$0xf]
  %v372 = vld [vmem:[%s3 + $0xb8] sm:$0xf]
  %v373 = vld [vmem:[%s3 + $0xbc] sm:$0xf]
  %v374 = vld [vmem:[%s3 + $0xc0] sm:$0xf]
  %v375 = vld [vmem:[%s3 + $0xc4] sm:$0xf]
  %v376 = vld [vmem:[%s3 + $0xc8] sm:$0xf]
  %v377 = vld [vmem:[%s3 + $0xcc] sm:$0xf]
  %v378 = vld [vmem:[%s3 + $0xd0] sm:$0xf]
  %v379 = vld [vmem:[%s3 + $0xd4] sm:$0xf]
  %v380 = vld [vmem:[%s3 + $0xd8] sm:$0xf]
  %v381 = vld [vmem:[%s3 + $0xdc] sm:$0xf]
  %v382 = vld [vmem:[%s3 + $0xe0] sm:$0xf]
  %v383 = vld [vmem:[%s3 + $0xe4] sm:$0xf]
  %v384 = vld [vmem:[%s3 + $0xe8] sm:$0xf]
  %v385 = vld [vmem:[%s3 + $0xec] sm:$0xf]
  %v386 = vld [vmem:[%s3 + $0xf0] sm:$0xf]
  %v387 = vld [vmem:[%s3 + $0xf4] sm:$0xf]
  %v388 = vld [vmem:[%s3 + $0xf8] sm:$0xf]
  %v389 = vld [vmem:[%s3 + $0xfc] sm:$0xf]
  %v390 = vld [vmem:[%s4] sm:$0x1]
  %v392 = vlaneseq
  %v393 = vshrl.u32 %v392, 7
  %v394 = vsub.s32 0, %v393
  %v395 = vrot.slane %v390, %v394
  %v461 = vunpack.c.l.b16 %v326
  %v462 = vunpack.c.l.b16 %v327
  %v463 = vunpack.c.l.b16 %v328
  %v464 = vunpack.c.l.b16 %v329
  %v465 = vunpack.c.l.b16 %v330
  %v466 = vunpack.c.l.b16 %v331
  %v467 = vunpack.c.l.b16 %v332
  %v468 = vunpack.c.l.b16 %v333
  %v469 = vunpack.c.l.b16 %v334
  %v470 = vunpack.c.l.b16 %v335
  %v471 = vunpack.c.l.b16 %v336
  %v472 = vunpack.c.l.b16 %v337
  %v473 = vunpack.c.l.b16 %v338
  %v474 = vunpack.c.l.b16 %v339
  %v475 = vunpack.c.l.b16 %v340
  %v476 = vunpack.c.l.b16 %v341
  %v477 = vunpack.c.l.b16 %v342
  %v478 = vunpack.c.l.b16 %v343
  %v479 = vunpack.c.l.b16 %v344
  %v480 = vunpack.c.l.b16 %v345
  %v481 = vunpack.c.l.b16 %v346
  %v482 = vunpack.c.l.b16 %v347
  %v483 = vunpack.c.l.b16 %v348
  %v484 = vunpack.c.l.b16 %v349
  %v485 = vunpack.c.l.b16 %v350
  %v486 = vunpack.c.l.b16 %v351
  %v487 = vunpack.c.l.b16 %v352
  %v488 = vunpack.c.l.b16 %v353
  %v489 = vunpack.c.l.b16 %v354
  %v490 = vunpack.c.l.b16 %v355
  %v491 = vunpack.c.l.b16 %v356
  %v492 = vunpack.c.l.b16 %v357
  %v493 = vunpack.c.l.b16 %v358
  %v494 = vunpack.c.l.b16 %v359
  %v495 = vunpack.c.l.b16 %v360
  %v496 = vunpack.c.l.b16 %v361
  %v497 = vunpack.c.l.b16 %v362
  %v498 = vunpack.c.l.b16 %v363
  %v499 = vunpack.c.l.b16 %v364
  %v500 = vunpack.c.l.b16 %v365
  %v501 = vunpack.c.l.b16 %v366
  %v502 = vunpack.c.l.b16 %v367
  %v503 = vunpack.c.l.b16 %v368
  %v504 = vunpack.c.l.b16 %v369
  %v505 = vunpack.c.l.b16 %v370
  %v506 = vunpack.c.l.b16 %v371
  %v507 = vunpack.c.l.b16 %v372
  %v508 = vunpack.c.l.b16 %v373
  %v509 = vunpack.c.l.b16 %v374
  %v510 = vunpack.c.l.b16 %v375
  %v511 = vunpack.c.l.b16 %v376
  %v512 = vunpack.c.l.b16 %v377
  %v513 = vunpack.c.l.b16 %v378
  %v514 = vunpack.c.l.b16 %v379
  %v515 = vunpack.c.l.b16 %v380
  %v516 = vunpack.c.l.b16 %v381
  %v517 = vunpack.c.l.b16 %v382
  %v518 = vunpack.c.l.b16 %v383
  %v519 = vunpack.c.l.b16 %v384
  %v520 = vunpack.c.l.b16 %v385
  %v521 = vunpack.c.l.b16 %v386
  %v522 = vunpack.c.l.b16 %v387
  %v523 = vunpack.c.l.b16 %v388
  %v524 = vunpack.c.l.b16 %v389
  %v525 = vpack.c.b16 %v462, %v461
  %v526 = vpack.c.b16 %v464, %v463
  %v527 = vpack.c.b16 %v466, %v465
  %v528 = vpack.c.b16 %v468, %v467
  %v529 = vpack.c.b16 %v470, %v469
  %v530 = vpack.c.b16 %v472, %v471
  %v531 = vpack.c.b16 %v474, %v473
  %v532 = vpack.c.b16 %v476, %v475
  %v533 = vpack.c.b16 %v478, %v477
  %v534 = vpack.c.b16 %v480, %v479
  %v535 = vpack.c.b16 %v482, %v481
  %v536 = vpack.c.b16 %v484, %v483
  %v537 = vpack.c.b16 %v486, %v485
  %v538 = vpack.c.b16 %v488, %v487
  %v539 = vpack.c.b16 %v490, %v489
  %v540 = vpack.c.b16 %v492, %v491
  %v541 = vpack.c.b16 %v494, %v493
  %v542 = vpack.c.b16 %v496, %v495
  %v543 = vpack.c.b16 %v498, %v497
  %v544 = vpack.c.b16 %v500, %v499
  %v545 = vpack.c.b16 %v502, %v501
  %v546 = vpack.c.b16 %v504, %v503
  %v547 = vpack.c.b16 %v506, %v505
  %v548 = vpack.c.b16 %v508, %v507
  %v549 = vpack.c.b16 %v510, %v509
  %v550 = vpack.c.b16 %v512, %v511
  %v551 = vpack.c.b16 %v514, %v513
  %v552 = vpack.c.b16 %v516, %v515
  %v553 = vpack.c.b16 %v518, %v517
  %v554 = vpack.c.b16 %v520, %v519
  %v555 = vpack.c.b16 %v522, %v521
  %v556 = vpack.c.b16 %v524, %v523
  %589 = vmatprep.subr.bf16.mxu0 0
  %590 = vmatpush1.bf16.msra.mxu0 %v532
  %591 = vmatprep.subr.bf16.mxu0 0
  %592 = vmatpush1.bf16.msra.mxu0 %v531
  %593 = vmatprep.subr.bf16.mxu0 0
  %594 = vmatpush1.bf16.msra.mxu0 %v530
  %595 = vmatprep.subr.bf16.mxu0 0
  %596 = vmatpush1.bf16.msra.mxu0 %v529
  %597 = vmatprep.subr.bf16.mxu0 0
  %598 = vmatpush1.bf16.msra.mxu0 %v528
  %599 = vmatprep.subr.bf16.mxu0 0
  %600 = vmatpush1.bf16.msra.mxu0 %v527
  %601 = vmatprep.subr.bf16.mxu0 0
  %602 = vmatpush1.bf16.msra.mxu0 %v526
  %603 = vmatprep.subr.bf16.mxu0 0
  %604 = vmatpush1.bf16.msra.mxu0 %v525
  %605 = vmatprep.subr.bf16.mxu0 0
  %606 = vmatpush2.bf16.msra.mxu0 %v540
  %607 = vmatprep.subr.bf16.mxu0 0
  %608 = vmatpush2.bf16.msra.mxu0 %v539
  %609 = vmatprep.subr.bf16.mxu0 0
  %610 = vmatpush2.bf16.msra.mxu0 %v538
  %611 = vmatprep.subr.bf16.mxu0 0
  %612 = vmatpush2.bf16.msra.mxu0 %v537
  %613 = vmatprep.subr.bf16.mxu0 0
  %614 = vmatpush2.bf16.msra.mxu0 %v536
  %615 = vmatprep.subr.bf16.mxu0 0
  %616 = vmatpush2.bf16.msra.mxu0 %v535
  %617 = vmatprep.subr.bf16.mxu0 0
  %618 = vmatpush2.bf16.msra.mxu0 %v534
  %619 = vmatprep.subr.bf16.mxu0 0
  %620 = vmatpush2.bf16.msra.mxu0 %v533
  %621 = vmatprep.mubr.bf16.mxu0 %v323
  %622 = vmatmul.mubr.bf16.gmra.mxu0 %v322
  %v623 = vpop.f32.mrf.mxu0
  %v624 = vadd.f32 %v395, %v623
  %v625 = vpop.f32.mrf.mxu0
  %v626 = vpop.f32.mrf.mxu0
  %v627 = vpop.f32.mrf.mxu0
  %628 = vdwg.mxu0
  %629 = vmatprep.subr.bf16.mxu0 0
  %630 = vmatpush1.bf16.msra.mxu0 %v548
  %631 = vmatprep.subr.bf16.mxu0 0
  %632 = vmatpush1.bf16.msra.mxu0 %v547
  %633 = vmatprep.subr.bf16.mxu0 0
  %634 = vmatpush1.bf16.msra.mxu0 %v546
  %635 = vmatprep.subr.bf16.mxu0 0
  %636 = vmatpush1.bf16.msra.mxu0 %v545
  %637 = vmatprep.subr.bf16.mxu0 0
  %638 = vmatpush1.bf16.msra.mxu0 %v544
  %639 = vmatprep.subr.bf16.mxu0 0
  %640 = vmatpush1.bf16.msra.mxu0 %v543
  %641 = vmatprep.subr.bf16.mxu0 0
  %642 = vmatpush1.bf16.msra.mxu0 %v542
  %643 = vmatprep.subr.bf16.mxu0 0
  %644 = vmatpush1.bf16.msra.mxu0 %v541
  %645 = vmatprep.subr.bf16.mxu0 0
  %646 = vmatpush2.bf16.msra.mxu0 %v556
  %647 = vmatprep.subr.bf16.mxu0 0
  %648 = vmatpush2.bf16.msra.mxu0 %v555
  %649 = vmatprep.subr.bf16.mxu0 0
  %650 = vmatpush2.bf16.msra.mxu0 %v554
  %651 = vmatprep.subr.bf16.mxu0 0
  %652 = vmatpush2.bf16.msra.mxu0 %v553
  %653 = vmatprep.subr.bf16.mxu0 0
  %654 = vmatpush2.bf16.msra.mxu0 %v552
  %655 = vmatprep.subr.bf16.mxu0 0
  %656 = vmatpush2.bf16.msra.mxu0 %v551
  %657 = vmatprep.subr.bf16.mxu0 0
  %658 = vmatpush2.bf16.msra.mxu0 %v550
  %659 = vmatprep.subr.bf16.mxu0 0
  %660 = vmatpush2.bf16.msra.mxu0 %v549
  %661 = vmatprep.mubr.bf16.mxu0 %v325
  %662 = vmatmul.mubr.bf16.gmra.mxu0 %v324
  %v663 = vpop.f32.mrf.mxu0
  %v664 = vadd.f32 %v624, %v663
  %v665 = vpop.f32.mrf.mxu0
  %v666 = vpop.f32.mrf.mxu0
  %v667 = vpop.f32.mrf.mxu0
  %668 = vdwg.mxu0
  %669 = vst [vmem:[%s5] sm:$0x3] %v664
  // Predicated region
  $region22: #{actor_critic_forward.7} parent=0 // pred_check
    _
  $region23: #{actor_critic_forward.7} parent=0 // pred_check_branch
    %671 = sbr.rel (0) target = $region25
  $region24: #{actor_critic_forward.7} parent=0 // pred_region
    _
  $region25: #{actor_critic_forward.7} parent=0 // pred_fallthru
    _
  // Predicated region
  $region26: #{actor_critic_forward.7} parent=0 // pred_check
    _
  $region27: #{actor_critic_forward.7} parent=0 // pred_check_branch
    %673 = sbr.rel (0) target = $region29
  $region28: #{actor_critic_forward.7} parent=0 // pred_region
    _
  $region29: #{actor_critic_forward.7} parent=0 // pred_fallthru
    _

</llo_original>
